<compile_context>
chip_gen: v7x
topology: tpu7x:2x2x1
jax: 0.10.0
libtpu: 0.0.40
codegen_flags: <defaults>
</compile_context>

<pallas_src>
import math
import numpy as np

import jax
import jax.numpy as jnp
from jax.experimental import pallas as pl
from jax.experimental.pallas import tpu as pltpu


# ----------------------------------------------------------------------------
# helpers
# ----------------------------------------------------------------------------
def _round_up(x: int, m: int) -> int:
    return (x + m - 1) // m * m


def _next_pow2(n: int) -> int:
    return int(2 ** math.ceil(math.log2(n)))


# ----------------------------------------------------------------------------
# deterministic weight construction (mirrors torchaudio / nnAudio __init__)
# ----------------------------------------------------------------------------
def make_resample_kernel(lowpass_filter_width: int = 6, rolloff: float = 0.99):
    """torchaudio _get_sinc_resample_kernel for orig_freq=1, new_freq=2."""
    orig_freq, new_freq = 1, 2
    base_freq = min(orig_freq, new_freq) * rolloff
    width = math.ceil(lowpass_filter_width * orig_freq / base_freq)
    idx = np.arange(-width, width + orig_freq, dtype=np.float64) / orig_freq
    kernels = []
    for i in range(new_freq):
        t = (-i / new_freq + idx) * base_freq
        t = np.clip(t, -lowpass_filter_width, lowpass_filter_width)
        window = np.cos(t * math.pi / lowpass_filter_width / 2.0) ** 2
        t = t * math.pi
        scale = base_freq / orig_freq
        safe_t = np.where(t == 0.0, 1.0, t)
        k = np.where(t == 0.0, 1.0, np.sin(safe_t) / safe_t) * window * scale
        kernels.append(k)
    # [new_freq=2, kernel_width=2*width+orig_freq=15]
    return np.stack(kernels, axis=0).astype(np.float32), width


def make_cqt_kernels(Q: float, fs: float, fmin: float, n_bins: int,
                     bins_per_octave: int):
    """nnAudio create_cqt_kernels (periodic hann window, l1 norm)."""
    freqs = fmin * 2.0 ** (np.arange(n_bins) / float(bins_per_octave))
    assert freqs[-1] < fs / 2.0, "top CQT bin exceeds Nyquist"
    fft_len = _next_pow2(int(math.ceil(Q * fs / fmin)))
    kern = np.zeros((n_bins, fft_len), dtype=np.complex128)
    lengths = np.ceil(Q * fs / freqs)
    for k in range(n_bins):
        freq = freqs[k]
        l = int(math.ceil(Q * fs / freq))
        if l % 2 == 1:
            start = int(math.ceil(fft_len / 2.0 - l / 2.0)) - 1
        else:
            start = int(math.ceil(fft_len / 2.0 - l / 2.0))
        n = np.arange(l) - int(math.ceil(l / 2.0))
        window = 0.5 - 0.5 * np.cos(2.0 * np.pi * np.arange(l) / l)
        sig = window * np.exp(1j * 2.0 * np.pi * n * freq / fs) / l
        sig = sig / np.linalg.norm(sig, 1)                           # l1 norm
        kern[k, start:start + l] = sig
    return (kern.real.astype(np.float32), kern.imag.astype(np.float32),
            fft_len, lengths.astype(np.float32))


# ----------------------------------------------------------------------------
# Pallas kernel 1: torchaudio 1->2 polyphase resample (VPU), 8 rows / step,
# writing each phase straight into the zero-padded chunk-flat layout.
# ----------------------------------------------------------------------------
def _resample_kernel_factory(T: int, left: int, c0, c1):
    kw = len(c0)

    def kernel(x_ref, o0_ref, o1_ref):
        # x_ref : (8, T + kw)  padded input rows (full (8,128) vreg occupancy)
        # o*_ref: (8, TOTAL)   polyphase rows, zero everywhere except [left, left+T)
        a0 = c0[0] * x_ref[:, 0:T]
        a1 = c1[0] * x_ref[:, 0:T]
        for j in range(1, kw):                        # static, fully unrolled
            seg = x_ref[:, j:j + T]                   # shifted (8, T) load
            a0 = a0 + c0[j] * seg
            a1 = a1 + c1[j] * seg
        # write directly into the chunk layout: zeros, data at offset `left`
        o0_ref[...] = jnp.zeros_like(o0_ref)
        o1_ref[...] = jnp.zeros_like(o1_ref)
        o0_ref[:, left:left + T] = a0
        o1_ref[:, left:left + T] = a1

    return kernel


def pallas_resample_to_chunks(x, res_kernel, left: int, total: int, rb: int = 8):
    """x: [B, T] at sr -> two polyphase rows [B_pad, total] at 2*sr, already
    laid out as the zero-padded flat chunk buffers the CQT kernel reads.
    out[:, left + n] = phase_i[n] (torchaudio: up[2n+i] = phase_i[n])."""
    B, T = x.shape
    kw = res_kernel.shape[1]
    width = (kw - 1) // 2
    b_pad = _round_up(max(B, rb), rb)
    # torchaudio pads (width, width + orig_freq) before the stride-1 conv;
    # extra bottom rows are zero and never read by the CQT grid.
    xp = jnp.pad(x, ((0, b_pad - B), (width, width + 1)))
    c0 = [float(v) for v in res_kernel[0]]
    c1 = [float(v) for v in res_kernel[1]]
    ph0, ph1 = pl.pallas_call(
        _resample_kernel_factory(T, left, c0, c1),
        out_shape=(jax.ShapeDtypeStruct((b_pad, total), jnp.float32),
                   jax.ShapeDtypeStruct((b_pad, total), jnp.float32)),
        grid=(b_pad // rb,),
        in_specs=[pl.BlockSpec((rb, T + kw), lambda r: (r, 0))],
        out_specs=(pl.BlockSpec((rb, total), lambda r: (r, 0)),
                   pl.BlockSpec((rb, total), lambda r: (r, 0))),
        compiler_params=pltpu.CompilerParams(
            dimension_semantics=("parallel",),
            vmem_limit_bytes=64 * 1024 * 1024),
    )(xp)
    return ph0, ph1


# ----------------------------------------------------------------------------
# Pallas kernel 2: CQT magnitude as a grouped, K-tiled framed complex conv
# over the two polyphase signals (bf16 MXU, f32 accumulate, lane-dense out).
# ----------------------------------------------------------------------------
def _cqt_kernel_factory(tm: int, jg: int, bins: int):
    def kernel(p0_ref, p1_ref, we_ref, wo_ref, o_ref, acc_ref):
        # p0_ref/p1_ref: (1, n_chunk, hh)  polyphase chunk rows (batch-resident)
        # we_ref/wo_ref: (jg, hh, nb2p)    bf16 fused re|im weights (this group)
        # o_ref        : (1, bins, tm)     lane-dense magnitude tile
        # acc_ref      : (tm, nb2p) f32    re|im accumulator across the reduction
        i = pl.program_id(1)
        g = pl.program_id(2)
        base = pl.multiple_of(i * tm, tm)

        # in-kernel framing: frame row r of reduction step (g*jg + j) is chunk
        # row (i*tm + r) + g*jg + j -> one contiguous sublane slice. jg steps
        # are grouped per grid step to amortise per-step pipeline overhead.
        s = None
        for j in range(jg):                              # static unroll
            row = base + g * jg + j
            l0 = p0_ref[0, pl.ds(row, tm), :].astype(jnp.bfloat16)
            l1 = p1_ref[0, pl.ds(row, tm), :].astype(jnp.bfloat16)
            p = jnp.dot(l0, we_ref[j], preferred_element_type=jnp.float32)
            p = p + jnp.dot(l1, wo_ref[j], preferred_element_type=jnp.float32)
            s = p if s is None else s + p

        @pl.when(g == 0)
        def _():                                         # no zero-init + add
            acc_ref[...] = s

        @pl.when(g > 0)
        def _():
            acc_ref[...] += s

        @pl.when(g == pl.num_programs(2) - 1)
        def _():
            # transpose the fully 128-aligned accumulator once, then slice bins:
            # output tile (bins, tm) is lane-dense -> unmasked stores, and the
            # wrapper transpose disappears. imag-conv sign is irrelevant under
            # magnitude; librosa sqrt(lengths) is folded into the weights.
            at = acc_ref[...].T                          # (nb2p, tm)
            re = at[:bins, :]
            im = at[bins:2 * bins, :]
            o_ref[0] = jnp.sqrt(re * re + im * im)

    return kernel


def pallas_cqt_magnitude(ph0, ph1, w_even, w_odd, *, bins: int, n_batch: int,
                         n_frames_p: int, tm: int, jg: int):
    """ph0/ph1: [B_pad, n_chunk, hh] polyphase chunks -> [B, bins, n_frames_p]."""
    _, n_chunk, hh = ph0.shape
    ck_pad, _, nb2p = w_even.shape
    n_tiles = n_frames_p // tm
    n_groups = ck_pad // jg

    flops = 2 * n_batch * n_frames_p * (2 * ck_pad * hh) * nb2p
    bytes_accessed = (2 * n_batch * n_chunk * hh * 4
                      + n_batch * n_tiles * 2 * ck_pad * hh * nb2p * 2
                      + n_batch * bins * n_frames_p * 4)

    out = pl.pallas_call(
        _cqt_kernel_factory(tm, jg, bins),
        out_shape=jax.ShapeDtypeStruct((n_batch, bins, n_frames_p), jnp.float32),
        grid=(n_batch, n_tiles, n_groups),
        in_specs=[
            # polyphase chunk rows stay VMEM-resident across the i and g axes
            pl.BlockSpec((1, n_chunk, hh), lambda b, i, g: (b, 0, 0)),
            pl.BlockSpec((1, n_chunk, hh), lambda b, i, g: (b, 0, 0)),
            # bf16 weights streamed one jg-group of hop-blocks per grid step
            pl.BlockSpec((jg, hh, nb2p), lambda b, i, g: (g, 0, 0)),
            pl.BlockSpec((jg, hh, nb2p), lambda b, i, g: (g, 0, 0)),
        ],
        # lane-dense output: (1, bins, tm) with tm a multiple of 128
        out_specs=pl.BlockSpec((1, bins, tm), lambda b, i, g: (b, 0, i)),
        scratch_shapes=[pltpu.VMEM((tm, nb2p), jnp.float32)],
        compiler_params=pltpu.CompilerParams(
            dimension_semantics=("parallel", "parallel", "arbitrary"),
            vmem_limit_bytes=64 * 1024 * 1024),
        cost_estimate=pl.CostEstimate(flops=int(flops), transcendentals=0,
                                      bytes_accessed=int(bytes_accessed)),
    )(ph0, ph1, w_even, w_odd)
    return out


# ----------------------------------------------------------------------------
# Module
# ----------------------------------------------------------------------------
class ConstantQTransform:
    def __init__(self, hop_length: int, fmin: float, bins: int,
                 bins_per_octave: int, sr: int = 16000):
        self.hop_length = hop_length
        self.bins = bins
        sr_up = sr * 2
        Q = 1.0 / (2.0 ** (1.0 / bins_per_octave) - 1.0)
        kr, ki, K, lengths = make_cqt_kernels(Q, sr_up, fmin, bins,
                                              bins_per_octave)
        assert K % 4 == 0, "CQT kernel length must be a multiple of 4"
        self.K = K
        self.left = K // 4                       # per-phase centre padding

        # Fold librosa sqrt(lengths) into the bases (exact under magnitude),
        # fuse real|imag into one [K, 2*bins] matrix, pad the column count to a
        # lane multiple, then split rows into even/odd polyphase halves so the
        # CQT consumes the two resampler phases directly:
        #   out[f, :] = sum_q ph0_pad[f*hh + q] * w[2q, :]
        #             + sum_q ph1_pad[f*hh + q] * w[2q+1, :]
        scale = np.sqrt(lengths)[None, :]                        # [1, bins]
        w = np.concatenate([kr.T * scale, ki.T * scale], axis=1)  # [K, 2*bins]
        nb2p = _round_up(2 * bins, 128)
        w = np.pad(w, ((0, 0), (0, nb2p - 2 * bins)))
        w_even, w_odd = w[0::2], w[1::2]                         # [K/2, nb2p]

        hh = hop_length                                          # per-phase hop
        ck = -(-(K // 2) // hh)                                  # kernel chunks
        self.jg = min(8, ck)                                     # group size
        ck_pad = _round_up(ck, self.jg)
        pad_rows = ck_pad * hh - K // 2
        w_even = np.pad(w_even, ((0, pad_rows), (0, 0)))
        w_odd = np.pad(w_odd, ((0, pad_rows), (0, 0)))
        self.hh = hh
        self.ck_pad = ck_pad
        self.nb2p = nb2p
        self.w_even = jnp.asarray(w_even.reshape(ck_pad, hh, nb2p),
                                  dtype=jnp.bfloat16)
        self.w_odd = jnp.asarray(w_odd.reshape(ck_pad, hh, nb2p),
                                 dtype=jnp.bfloat16)

        rk, _ = make_resample_kernel()
        self.res_kernel = rk                                     # np [2, 15]

    def __call__(self, inputs):
        """inputs: [B, T] float32 -> [B, bins, T // hop_length + 1]."""
        x = inputs.astype(jnp.float32)
        B, T = x.shape
        hh, ck_pad, jg = self.hh, self.ck_pad, self.jg

        n_frames = T // self.hop_length + 1      # == (2T) // (2*hop_length) + 1
        tm = min(512, _round_up(n_frames, 128))  # lane-dense frame tile
        n_frames_p = _round_up(n_frames, tm)
        n_chunk = max(n_frames_p + ck_pad - 1, -(-(self.left + T) // hh))
        total = n_chunk * hh

        ph0, ph1 = pallas_resample_to_chunks(x, self.res_kernel,
                                             self.left, total)
        ph0 = ph0.reshape(ph0.shape[0], n_chunk, hh)             # free reshape
        ph1 = ph1.reshape(ph1.shape[0], n_chunk, hh)

        mag = pallas_cqt_magnitude(ph0, ph1, self.w_even, self.w_odd,
                                   bins=self.bins, n_batch=B,
                                   n_frames_p=n_frames_p, tm=tm, jg=jg)
        return mag[:, :, :n_frames]                              # [B, bins, F]


# ----------------------------------------------------------------------------
# demo
# ----------------------------------------------------------------------------
if __name__ == "__main__":
    key = jax.random.PRNGKey(0)
    B, T = 2, 1024
    hop_length, fmin, bins, bins_per_octave, sr = 64, 1000.0, 16, 8, 16000

    x = jax.random.normal(key, (B, T), dtype=jnp.float32)
    cqt = ConstantQTransform(hop_length, fmin, bins, bins_per_octave, sr)
    out = jax.block_until_ready(cqt(x))

    expected_frames = (2 * T) // (2 * hop_length) + 1
    assert out.shape == (B, bins, expected_frames), out.shape
    assert out.dtype == jnp.float32
    assert bool(jnp.all(jnp.isfinite(out)))
    print("KERNEL_OK")
</pallas_src>

<mosaic_0001>
module attributes {stable_mosaic.version = 11 : i64} {
  func.func @kernel(%arg0: i32, %arg1: memref<8x1039xf32, #tpu.memory_space<vmem>>, %arg2: memref<8x8384xf32, #tpu.memory_space<vmem>>, %arg3: memref<8x8384xf32, #tpu.memory_space<vmem>>) attributes {dimension_semantics = [#tpu.dimension_semantics<parallel>], iteration_bounds = array<i64: 1>, scalar_prefetch = 0 : i64, scratch_operands = 0 : i64, tpu.core_type = #tpu.core_type<tc>, window_params = [{transform_indices = @transform_0, window_bounds = array<i64: 8, 1039>}, {transform_indices = @transform_1, window_bounds = array<i64: 8, 8384>}, {transform_indices = @transform_2, window_bounds = array<i64: 8, 8384>}]} {
    %c0 = arith.constant 0 : index
    %c0_0 = arith.constant 0 : index
    %0 = vector.load %arg1[%c0, %c0_0] : memref<8x1039xf32, #tpu.memory_space<vmem>>, vector<8x1024xf32>
    %cst = arith.constant -0.000000e+00 : f32
    %1 = vector.broadcast %cst : f32 to vector<8x1024xf32>
    %2 = arith.mulf %1, %0 : vector<8x1024xf32>
    %c0_1 = arith.constant 0 : index
    %c0_2 = arith.constant 0 : index
    %3 = vector.load %arg1[%c0_1, %c0_2] : memref<8x1039xf32, #tpu.memory_space<vmem>>, vector<8x1024xf32>
    %cst_3 = arith.constant -0.000000e+00 : f32
    %4 = vector.broadcast %cst_3 : f32 to vector<8x1024xf32>
    %5 = arith.mulf %4, %3 : vector<8x1024xf32>
    %c0_4 = arith.constant 0 : index
    %c1 = arith.constant 1 : index
    %6 = vector.load %arg1[%c0_4, %c1] : memref<8x1039xf32, #tpu.memory_space<vmem>>, vector<8x1024xf32>
    %cst_5 = arith.constant -2.4526139E-6 : f32
    %7 = vector.broadcast %cst_5 : f32 to vector<8x1024xf32>
    %8 = arith.mulf %7, %6 : vector<8x1024xf32>
    %9 = arith.addf %2, %8 : vector<8x1024xf32>
    %cst_6 = arith.constant -0.000000e+00 : f32
    %10 = vector.broadcast %cst_6 : f32 to vector<8x1024xf32>
    %11 = arith.mulf %10, %6 : vector<8x1024xf32>
    %12 = arith.addf %5, %11 : vector<8x1024xf32>
    %c0_7 = arith.constant 0 : index
    %c2 = arith.constant 2 : index
    %13 = vector.load %arg1[%c0_7, %c2] : memref<8x1039xf32, #tpu.memory_space<vmem>>, vector<8x1024xf32>
    %cst_8 = arith.constant 7.33772933E-4 : f32
    %14 = vector.broadcast %cst_8 : f32 to vector<8x1024xf32>
    %15 = arith.mulf %14, %13 : vector<8x1024xf32>
    %16 = arith.addf %9, %15 : vector<8x1024xf32>
    %cst_9 = arith.constant -0.00119518931 : f32
    %17 = vector.broadcast %cst_9 : f32 to vector<8x1024xf32>
    %18 = arith.mulf %17, %13 : vector<8x1024xf32>
    %19 = arith.addf %12, %18 : vector<8x1024xf32>
    %c0_10 = arith.constant 0 : index
    %c3 = arith.constant 3 : index
    %20 = vector.load %arg1[%c0_10, %c3] : memref<8x1039xf32, #tpu.memory_space<vmem>>, vector<8x1024xf32>
    %cst_11 = arith.constant -0.00258441712 : f32
    %21 = vector.broadcast %cst_11 : f32 to vector<8x1024xf32>
    %22 = arith.mulf %21, %20 : vector<8x1024xf32>
    %23 = arith.addf %16, %22 : vector<8x1024xf32>
    %cst_12 = arith.constant 0.0108458297 : f32
    %24 = vector.broadcast %cst_12 : f32 to vector<8x1024xf32>
    %25 = arith.mulf %24, %20 : vector<8x1024xf32>
    %26 = arith.addf %19, %25 : vector<8x1024xf32>
    %c0_13 = arith.constant 0 : index
    %c4 = arith.constant 4 : index
    %27 = vector.load %arg1[%c0_13, %c4] : memref<8x1039xf32, #tpu.memory_space<vmem>>, vector<8x1024xf32>
    %cst_14 = arith.constant 0.00507102162 : f32
    %28 = vector.broadcast %cst_14 : f32 to vector<8x1024xf32>
    %29 = arith.mulf %28, %27 : vector<8x1024xf32>
    %30 = arith.addf %23, %29 : vector<8x1024xf32>
    %cst_15 = arith.constant -0.0343020633 : f32
    %31 = vector.broadcast %cst_15 : f32 to vector<8x1024xf32>
    %32 = arith.mulf %31, %27 : vector<8x1024xf32>
    %33 = arith.addf %26, %32 : vector<8x1024xf32>
    %c0_16 = arith.constant 0 : index
    %c5 = arith.constant 5 : index
    %34 = vector.load %arg1[%c0_16, %c5] : memref<8x1039xf32, #tpu.memory_space<vmem>>, vector<8x1024xf32>
    %cst_17 = arith.constant -0.00754024368 : f32
    %35 = vector.broadcast %cst_17 : f32 to vector<8x1024xf32>
    %36 = arith.mulf %35, %34 : vector<8x1024xf32>
    %37 = arith.addf %30, %36 : vector<8x1024xf32>
    %cst_18 = arith.constant 0.0806928947 : f32
    %38 = vector.broadcast %cst_18 : f32 to vector<8x1024xf32>
    %39 = arith.mulf %38, %34 : vector<8x1024xf32>
    %40 = arith.addf %33, %39 : vector<8x1024xf32>
    %c0_19 = arith.constant 0 : index
    %c6 = arith.constant 6 : index
    %41 = vector.load %arg1[%c0_19, %c6] : memref<8x1039xf32, #tpu.memory_space<vmem>>, vector<8x1024xf32>
    %cst_20 = arith.constant 0.00934162084 : f32
    %42 = vector.broadcast %cst_20 : f32 to vector<8x1024xf32>
    %43 = arith.mulf %42, %41 : vector<8x1024xf32>
    %44 = arith.addf %37, %43 : vector<8x1024xf32>
    %cst_21 = arith.constant -0.181514859 : f32
    %45 = vector.broadcast %cst_21 : f32 to vector<8x1024xf32>
    %46 = arith.mulf %45, %41 : vector<8x1024xf32>
    %47 = arith.addf %40, %46 : vector<8x1024xf32>
    %c0_22 = arith.constant 0 : index
    %c7 = arith.constant 7 : index
    %48 = vector.load %arg1[%c0_22, %c7] : memref<8x1039xf32, #tpu.memory_space<vmem>>, vector<8x1024xf32>
    %cst_23 = arith.constant 9.900000e-01 : f32
    %49 = vector.broadcast %cst_23 : f32 to vector<8x1024xf32>
    %50 = arith.mulf %49, %48 : vector<8x1024xf32>
    %51 = arith.addf %44, %50 : vector<8x1024xf32>
    %cst_24 = arith.constant 0.625911056 : f32
    %52 = vector.broadcast %cst_24 : f32 to vector<8x1024xf32>
    %53 = arith.mulf %52, %48 : vector<8x1024xf32>
    %54 = arith.addf %47, %53 : vector<8x1024xf32>
    %c0_25 = arith.constant 0 : index
    %c8 = arith.constant 8 : index
    %55 = vector.load %arg1[%c0_25, %c8] : memref<8x1039xf32, #tpu.memory_space<vmem>>, vector<8x1024xf32>
    %cst_26 = arith.constant 0.00934162084 : f32
    %56 = vector.broadcast %cst_26 : f32 to vector<8x1024xf32>
    %57 = arith.mulf %56, %55 : vector<8x1024xf32>
    %58 = arith.addf %51, %57 : vector<8x1024xf32>
    %cst_27 = arith.constant 0.625911056 : f32
    %59 = vector.broadcast %cst_27 : f32 to vector<8x1024xf32>
    %60 = arith.mulf %59, %55 : vector<8x1024xf32>
    %61 = arith.addf %54, %60 : vector<8x1024xf32>
    %c0_28 = arith.constant 0 : index
    %c9 = arith.constant 9 : index
    %62 = vector.load %arg1[%c0_28, %c9] : memref<8x1039xf32, #tpu.memory_space<vmem>>, vector<8x1024xf32>
    %cst_29 = arith.constant -0.00754024368 : f32
    %63 = vector.broadcast %cst_29 : f32 to vector<8x1024xf32>
    %64 = arith.mulf %63, %62 : vector<8x1024xf32>
    %65 = arith.addf %58, %64 : vector<8x1024xf32>
    %cst_30 = arith.constant -0.181514859 : f32
    %66 = vector.broadcast %cst_30 : f32 to vector<8x1024xf32>
    %67 = arith.mulf %66, %62 : vector<8x1024xf32>
    %68 = arith.addf %61, %67 : vector<8x1024xf32>
    %c0_31 = arith.constant 0 : index
    %c10 = arith.constant 10 : index
    %69 = vector.load %arg1[%c0_31, %c10] : memref<8x1039xf32, #tpu.memory_space<vmem>>, vector<8x1024xf32>
    %cst_32 = arith.constant 0.00507102162 : f32
    %70 = vector.broadcast %cst_32 : f32 to vector<8x1024xf32>
    %71 = arith.mulf %70, %69 : vector<8x1024xf32>
    %72 = arith.addf %65, %71 : vector<8x1024xf32>
    %cst_33 = arith.constant 0.0806928947 : f32
    %73 = vector.broadcast %cst_33 : f32 to vector<8x1024xf32>
    %74 = arith.mulf %73, %69 : vector<8x1024xf32>
    %75 = arith.addf %68, %74 : vector<8x1024xf32>
    %c0_34 = arith.constant 0 : index
    %c11 = arith.constant 11 : index
    %76 = vector.load %arg1[%c0_34, %c11] : memref<8x1039xf32, #tpu.memory_space<vmem>>, vector<8x1024xf32>
    %cst_35 = arith.constant -0.00258441712 : f32
    %77 = vector.broadcast %cst_35 : f32 to vector<8x1024xf32>
    %78 = arith.mulf %77, %76 : vector<8x1024xf32>
    %79 = arith.addf %72, %78 : vector<8x1024xf32>
    %cst_36 = arith.constant -0.0343020633 : f32
    %80 = vector.broadcast %cst_36 : f32 to vector<8x1024xf32>
    %81 = arith.mulf %80, %76 : vector<8x1024xf32>
    %82 = arith.addf %75, %81 : vector<8x1024xf32>
    %c0_37 = arith.constant 0 : index
    %c12 = arith.constant 12 : index
    %83 = vector.load %arg1[%c0_37, %c12] : memref<8x1039xf32, #tpu.memory_space<vmem>>, vector<8x1024xf32>
    %cst_38 = arith.constant 7.33772933E-4 : f32
    %84 = vector.broadcast %cst_38 : f32 to vector<8x1024xf32>
    %85 = arith.mulf %84, %83 : vector<8x1024xf32>
    %86 = arith.addf %79, %85 : vector<8x1024xf32>
    %cst_39 = arith.constant 0.0108458297 : f32
    %87 = vector.broadcast %cst_39 : f32 to vector<8x1024xf32>
    %88 = arith.mulf %87, %83 : vector<8x1024xf32>
    %89 = arith.addf %82, %88 : vector<8x1024xf32>
    %c0_40 = arith.constant 0 : index
    %c13 = arith.constant 13 : index
    %90 = vector.load %arg1[%c0_40, %c13] : memref<8x1039xf32, #tpu.memory_space<vmem>>, vector<8x1024xf32>
    %cst_41 = arith.constant -2.4526139E-6 : f32
    %91 = vector.broadcast %cst_41 : f32 to vector<8x1024xf32>
    %92 = arith.mulf %91, %90 : vector<8x1024xf32>
    %93 = arith.addf %86, %92 : vector<8x1024xf32>
    %cst_42 = arith.constant -0.00119518931 : f32
    %94 = vector.broadcast %cst_42 : f32 to vector<8x1024xf32>
    %95 = arith.mulf %94, %90 : vector<8x1024xf32>
    %96 = arith.addf %89, %95 : vector<8x1024xf32>
    %c0_43 = arith.constant 0 : index
    %c14 = arith.constant 14 : index
    %97 = vector.load %arg1[%c0_43, %c14] : memref<8x1039xf32, #tpu.memory_space<vmem>>, vector<8x1024xf32>
    %cst_44 = arith.constant -0.000000e+00 : f32
    %98 = vector.broadcast %cst_44 : f32 to vector<8x1024xf32>
    %99 = arith.mulf %98, %97 : vector<8x1024xf32>
    %100 = arith.addf %93, %99 : vector<8x1024xf32>
    %cst_45 = arith.constant -0.000000e+00 : f32
    %101 = vector.broadcast %cst_45 : f32 to vector<8x1024xf32>
    %102 = arith.mulf %101, %97 : vector<8x1024xf32>
    %103 = arith.addf %96, %102 : vector<8x1024xf32>
    %cst_46 = arith.constant 0.000000e+00 : f32
    %104 = vector.broadcast %cst_46 : f32 to vector<8x8384xf32>
    %c0_47 = arith.constant 0 : index
    %c0_48 = arith.constant 0 : index
    %105 = vector.load %arg2[%c0_47, %c0_48] : memref<8x8384xf32, #tpu.memory_space<vmem>>, vector<8x8384xf32>
    tpu.vector_store %arg2[%c0_47, %c0_48], %104 {strides = array<i32>} : memref<8x8384xf32, #tpu.memory_space<vmem>>, vector<8x8384xf32>,
    %cst_49 = arith.constant 0.000000e+00 : f32
    %106 = vector.broadcast %cst_49 : f32 to vector<8x8384xf32>
    %c0_50 = arith.constant 0 : index
    %c0_51 = arith.constant 0 : index
    %107 = vector.load %arg3[%c0_50, %c0_51] : memref<8x8384xf32, #tpu.memory_space<vmem>>, vector<8x8384xf32>
    tpu.vector_store %arg3[%c0_50, %c0_51], %106 {strides = array<i32>} : memref<8x8384xf32, #tpu.memory_space<vmem>>, vector<8x8384xf32>,
    %c0_52 = arith.constant 0 : index
    %c128 = arith.constant 128 : index
    %108 = vector.load %arg2[%c0_52, %c128] : memref<8x8384xf32, #tpu.memory_space<vmem>>, vector<8x1024xf32>
    tpu.vector_store %arg2[%c0_52, %c128], %100 {strides = array<i32>} : memref<8x8384xf32, #tpu.memory_space<vmem>>, vector<8x1024xf32>,
    %c0_53 = arith.constant 0 : index
    %c128_54 = arith.constant 128 : index
    %109 = vector.load %arg3[%c0_53, %c128_54] : memref<8x8384xf32, #tpu.memory_space<vmem>>, vector<8x1024xf32>
    tpu.vector_store %arg3[%c0_53, %c128_54], %103 {strides = array<i32>} : memref<8x8384xf32, #tpu.memory_space<vmem>>, vector<8x1024xf32>,
    return
  }
  func.func @transform_0(%arg0: i32) -> (i32, i32) {
    %c0_i32 = arith.constant 0 : i32
    %c0_i32_0 = arith.constant 0 : i32
    return %arg0, %c0_i32 : i32, i32
  }
  func.func @transform_1(%arg0: i32) -> (i32, i32) {
    %c0_i32 = arith.constant 0 : i32
    %c0_i32_0 = arith.constant 0 : i32
    return %arg0, %c0_i32 : i32, i32
  }
  func.func @transform_2(%arg0: i32) -> (i32, i32) {
    %c0_i32 = arith.constant 0 : i32
    %c0_i32_0 = arith.constant 0 : i32
    return %arg0, %c0_i32 : i32, i32
  }
}

</mosaic_0001>

<llo_original>
// kernel: tpu_custom_call.1
$region0: #{tpu_custom_call.1}
  #allocation0 [shape = 'u32[]', space=smem, size = 0x4, offset = 0x4, fixed_abs, tag = 'smem constant byte address 0x4 - core index']
  #allocation1 [shape = 'u32[144,128]{1,0:T(1,128)}', space=vmem, size = 0x12000, scoped, tag = 'internal scratch']
  %s0 = inlined_call_operand.hbm [shape: f32[8,1039], index: 0, kind: input, shape index: {}]
  %s1 = inlined_call_operand.hbm [shape: f32[8,8384], index: 1, kind: output, shape index: {0}]
  %s2 = inlined_call_operand.hbm [shape: f32[8,8384], index: 2, kind: output, shape index: {1}]
  %3 = xla_tuple %s1, %s2
  %s4 = sld [smem:[#allocation0]]
  $region26: #{tpu_custom_call.1} parent=0
    _
  %s6 = ssub.s32 1, %s4
  %s7 = scalar_select 0, %s6, %s4
  $region1: #{tpu_custom_call.1} parent=0
    #allocation2 [shape = 'u8[36864]{0}', space=vmem, size = 0x9000, scoped, tag = 'input window, operand 0, single buffered']
    #allocation3 [shape = 's32[1]{0}', space=sflag, size = 0x4, scoped, tag = 'scoped memory for tpu_custom_call.1']
    #allocation4 [shape = 's32[1]{0}', space=sflag, size = 0x4, scoped, tag = 'scoped memory for tpu_custom_call.1']
    #allocation5 [shape = 'u8[270336]{0}', space=vmem, size = 0x42000, scoped, tag = 'output window, operand 0, single buffered']
    #allocation6 [shape = 'u8[270336]{0}', space=vmem, size = 0x42000, scoped, tag = 'output window, operand 1, single buffered']
    #allocation7 [shape = 's32[1]{0}', space=sflag, size = 0x4, scoped, tag = 'scoped memory for tpu_custom_call.1']
    %8 = vsyncpa [#allocation3], 0
    %9 = vsyncpa [#allocation4], 0
    %10 = vsyncpa [#allocation7], 0
    // Predicated region
    $region2: #{tpu_custom_call.1} parent=1 // pred_check
      _
    $region3: #{tpu_custom_call.1} parent=1 // pred_check_branch
      %12 = sbr.rel (0) target = $region5
    $region4: #{tpu_custom_call.1} parent=1 // pred_region
      %s14 = ssub.s32 1152, 1152
      %15 = vsyncadd [#allocation3], %s14
      %s17 = sshll.u32 [#allocation2], 4
      %s18 = int_to_ptr.vmem [resolvable:$true] %s17
      %20 = dma.hbm_to_vmem [thread:$0]  %s0, 1152, %s18, [#allocation3]
    $region5: #{tpu_custom_call.1} parent=1 // pred_fallthru
      _
    // Predicated region
    $region6: #{tpu_custom_call.1} parent=1 // pred_check
      _
    $region7: #{tpu_custom_call.1} parent=1 // pred_check_branch
      %22 = sbr.rel (0) target = $region9
    $region8: #{tpu_custom_call.1} parent=1 // pred_region
      %23 = dma.done [#allocation3], 1152
    $region9: #{tpu_custom_call.1} parent=1 // pred_fallthru
      _
    %v24 = vld [vmem:[#allocation2] sm:$0xff]
    %v25 = vld [vmem:[#allocation2 + $0x8] sm:$0xff]
    %v26 = vld [vmem:[#allocation2 + $0x10] sm:$0xff]
    %v27 = vld [vmem:[#allocation2 + $0x18] sm:$0xff]
    %v28 = vld [vmem:[#allocation2 + $0x20] sm:$0xff]
    %v29 = vld [vmem:[#allocation2 + $0x28] sm:$0xff]
    %v30 = vld [vmem:[#allocation2 + $0x30] sm:$0xff]
    %v31 = vld [vmem:[#allocation2 + $0x38] sm:$0xff]
    %v32 = vmul.f32 %v24, -0.0
    %v33 = vmul.f32 %v25, -0.0
    %v34 = vmul.f32 %v26, -0.0
    %v35 = vmul.f32 %v27, -0.0
    %v36 = vmul.f32 %v28, -0.0
    %v37 = vmul.f32 %v29, -0.0
    %v38 = vmul.f32 %v30, -0.0
    %v39 = vmul.f32 %v31, -0.0
    %v40 = vld [vmem:[#allocation2 + $0x40] sm:$0xff]
    %v41 = vmul.f32 %v24, -2.452614e-06
    %v42 = vmul.f32 %v25, -2.452614e-06
    %v43 = vmul.f32 %v26, -2.452614e-06
    %v44 = vmul.f32 %v27, -2.452614e-06
    %v45 = vmul.f32 %v28, -2.452614e-06
    %v46 = vmul.f32 %v29, -2.452614e-06
    %v47 = vmul.f32 %v30, -2.452614e-06
    %v48 = vmul.f32 %v31, -2.452614e-06
    %v49 = vmul.f32 %v40, -2.452614e-06
    %59 = vrot.lane.b32.xlu0 %v41, 127
    %v60 = vpop.permute.xlu0 %59
    %61 = vrot.lane.b32.xlu0 %v42, 127
    %v62 = vpop.permute.xlu0 %61
    %63 = vrot.lane.b32.xlu0 %v43, 127
    %v64 = vpop.permute.xlu0 %63
    %65 = vrot.lane.b32.xlu0 %v44, 127
    %v66 = vpop.permute.xlu0 %65
    %67 = vrot.lane.b32.xlu0 %v45, 127
    %v68 = vpop.permute.xlu0 %67
    %69 = vrot.lane.b32.xlu0 %v46, 127
    %v70 = vpop.permute.xlu0 %69
    %71 = vrot.lane.b32.xlu0 %v47, 127
    %v72 = vpop.permute.xlu0 %71
    %73 = vrot.lane.b32.xlu0 %v48, 127
    %v74 = vpop.permute.xlu0 %73
    %75 = vrot.lane.b32.xlu0 %v49, 127
    %v76 = vpop.permute.xlu0 %75
    %vm77 = vcmask 1039360
    %v78 = vsel %vm77, %v60, %v62
    %v79 = vsel %vm77, %v62, %v64
    %v80 = vsel %vm77, %v64, %v66
    %v81 = vsel %vm77, %v66, %v68
    %v82 = vsel %vm77, %v68, %v70
    %v83 = vsel %vm77, %v70, %v72
    %v84 = vsel %vm77, %v72, %v74
    %v85 = vsel %vm77, %v74, %v76
    %v94 = vadd.f32 %v32, %v78
    %v95 = vadd.f32 %v33, %v79
    %v96 = vadd.f32 %v34, %v80
    %v97 = vadd.f32 %v35, %v81
    %v98 = vadd.f32 %v36, %v82
    %v99 = vadd.f32 %v37, %v83
    %v100 = vadd.f32 %v38, %v84
    %v101 = vadd.f32 %v39, %v85
    %v102 = vmul.f32 %v40, -0.0
    %112 = vrot.lane.b32.xlu0 %v32, 127
    %v113 = vpop.permute.xlu0 %112
    %114 = vrot.lane.b32.xlu0 %v33, 127
    %v115 = vpop.permute.xlu0 %114
    %116 = vrot.lane.b32.xlu0 %v34, 127
    %v117 = vpop.permute.xlu0 %116
    %118 = vrot.lane.b32.xlu0 %v35, 127
    %v119 = vpop.permute.xlu0 %118
    %120 = vrot.lane.b32.xlu0 %v36, 127
    %v121 = vpop.permute.xlu0 %120
    %122 = vrot.lane.b32.xlu0 %v37, 127
    %v123 = vpop.permute.xlu0 %122
    %124 = vrot.lane.b32.xlu0 %v38, 127
    %v125 = vpop.permute.xlu0 %124
    %126 = vrot.lane.b32.xlu0 %v39, 127
    %v127 = vpop.permute.xlu0 %126
    %128 = vrot.lane.b32.xlu0 %v102, 127
    %v129 = vpop.permute.xlu0 %128
    %v130 = vsel %vm77, %v113, %v115
    %v131 = vsel %vm77, %v115, %v117
    %v132 = vsel %vm77, %v117, %v119
    %v133 = vsel %vm77, %v119, %v121
    %v134 = vsel %vm77, %v121, %v123
    %v135 = vsel %vm77, %v123, %v125
    %v136 = vsel %vm77, %v125, %v127
    %v137 = vsel %vm77, %v127, %v129
    %v146 = vadd.f32 %v32, %v130
    %v147 = vadd.f32 %v33, %v131
    %v148 = vadd.f32 %v34, %v132
    %v149 = vadd.f32 %v35, %v133
    %v150 = vadd.f32 %v36, %v134
    %v151 = vadd.f32 %v37, %v135
    %v152 = vadd.f32 %v38, %v136
    %v153 = vadd.f32 %v39, %v137
    %v154 = vmul.f32 %v24, 0.00073377293
    %v155 = vmul.f32 %v25, 0.00073377293
    %v156 = vmul.f32 %v26, 0.00073377293
    %v157 = vmul.f32 %v27, 0.00073377293
    %v158 = vmul.f32 %v28, 0.00073377293
    %v159 = vmul.f32 %v29, 0.00073377293
    %v160 = vmul.f32 %v30, 0.00073377293
    %v161 = vmul.f32 %v31, 0.00073377293
    %v162 = vmul.f32 %v40, 0.00073377293
    %172 = vrot.lane.b32.xlu0 %v154, 126
    %v173 = vpop.permute.xlu0 %172
    %174 = vrot.lane.b32.xlu0 %v155, 126
    %v175 = vpop.permute.xlu0 %174
    %176 = vrot.lane.b32.xlu0 %v156, 126
    %v177 = vpop.permute.xlu0 %176
    %178 = vrot.lane.b32.xlu0 %v157, 126
    %v179 = vpop.permute.xlu0 %178
    %180 = vrot.lane.b32.xlu0 %v158, 126
    %v181 = vpop.permute.xlu0 %180
    %182 = vrot.lane.b32.xlu0 %v159, 126
    %v183 = vpop.permute.xlu0 %182
    %184 = vrot.lane.b32.xlu0 %v160, 126
    %v185 = vpop.permute.xlu0 %184
    %186 = vrot.lane.b32.xlu0 %v161, 126
    %v187 = vpop.permute.xlu0 %186
    %188 = vrot.lane.b32.xlu0 %v162, 126
    %v189 = vpop.permute.xlu0 %188
    %vm190 = vcmask 1031168
    %v191 = vsel %vm190, %v173, %v175
    %v192 = vsel %vm190, %v175, %v177
    %v193 = vsel %vm190, %v177, %v179
    %v194 = vsel %vm190, %v179, %v181
    %v195 = vsel %vm190, %v181, %v183
    %v196 = vsel %vm190, %v183, %v185
    %v197 = vsel %vm190, %v185, %v187
    %v198 = vsel %vm190, %v187, %v189
    %v207 = vadd.f32 %v94, %v191
    %v208 = vadd.f32 %v95, %v192
    %v209 = vadd.f32 %v96, %v193
    %v210 = vadd.f32 %v97, %v194
    %v211 = vadd.f32 %v98, %v195
    %v212 = vadd.f32 %v99, %v196
    %v213 = vadd.f32 %v100, %v197
    %v214 = vadd.f32 %v101, %v198
    %v215 = vmul.f32 %v24, -0.0011951893
    %v216 = vmul.f32 %v25, -0.0011951893
    %v217 = vmul.f32 %v26, -0.0011951893
    %v218 = vmul.f32 %v27, -0.0011951893
    %v219 = vmul.f32 %v28, -0.0011951893
    %v220 = vmul.f32 %v29, -0.0011951893
    %v221 = vmul.f32 %v30, -0.0011951893
    %v222 = vmul.f32 %v31, -0.0011951893
    %v223 = vmul.f32 %v40, -0.0011951893
    %233 = vrot.lane.b32.xlu0 %v215, 126
    %v234 = vpop.permute.xlu0 %233
    %235 = vrot.lane.b32.xlu0 %v216, 126
    %v236 = vpop.permute.xlu0 %235
    %237 = vrot.lane.b32.xlu0 %v217, 126
    %v238 = vpop.permute.xlu0 %237
    %239 = vrot.lane.b32.xlu0 %v218, 126
    %v240 = vpop.permute.xlu0 %239
    %241 = vrot.lane.b32.xlu0 %v219, 126
    %v242 = vpop.permute.xlu0 %241
    %243 = vrot.lane.b32.xlu0 %v220, 126
    %v244 = vpop.permute.xlu0 %243
    %245 = vrot.lane.b32.xlu0 %v221, 126
    %v246 = vpop.permute.xlu0 %245
    %247 = vrot.lane.b32.xlu0 %v222, 126
    %v248 = vpop.permute.xlu0 %247
    %249 = vrot.lane.b32.xlu0 %v223, 126
    %v250 = vpop.permute.xlu0 %249
    %v251 = vsel %vm190, %v234, %v236
    %v252 = vsel %vm190, %v236, %v238
    %v253 = vsel %vm190, %v238, %v240
    %v254 = vsel %vm190, %v240, %v242
    %v255 = vsel %vm190, %v242, %v244
    %v256 = vsel %vm190, %v244, %v246
    %v257 = vsel %vm190, %v246, %v248
    %v258 = vsel %vm190, %v248, %v250
    %v267 = vadd.f32 %v146, %v251
    %v268 = vadd.f32 %v147, %v252
    %v269 = vadd.f32 %v148, %v253
    %v270 = vadd.f32 %v149, %v254
    %v271 = vadd.f32 %v150, %v255
    %v272 = vadd.f32 %v151, %v256
    %v273 = vadd.f32 %v152, %v257
    %v274 = vadd.f32 %v153, %v258
    %v275 = vmul.f32 %v24, -0.0025844171
    %v276 = vmul.f32 %v25, -0.0025844171
    %v277 = vmul.f32 %v26, -0.0025844171
    %v278 = vmul.f32 %v27, -0.0025844171
    %v279 = vmul.f32 %v28, -0.0025844171
    %v280 = vmul.f32 %v29, -0.0025844171
    %v281 = vmul.f32 %v30, -0.0025844171
    %v282 = vmul.f32 %v31, -0.0025844171
    %v283 = vmul.f32 %v40, -0.0025844171
    %293 = vrot.lane.b32.xlu0 %v275, 125
    %v294 = vpop.permute.xlu0 %293
    %295 = vrot.lane.b32.xlu0 %v276, 125
    %v296 = vpop.permute.xlu0 %295
    %297 = vrot.lane.b32.xlu0 %v277, 125
    %v298 = vpop.permute.xlu0 %297
    %299 = vrot.lane.b32.xlu0 %v278, 125
    %v300 = vpop.permute.xlu0 %299
    %301 = vrot.lane.b32.xlu0 %v279, 125
    %v302 = vpop.permute.xlu0 %301
    %303 = vrot.lane.b32.xlu0 %v280, 125
    %v304 = vpop.permute.xlu0 %303
    %305 = vrot.lane.b32.xlu0 %v281, 125
    %v306 = vpop.permute.xlu0 %305
    %307 = vrot.lane.b32.xlu0 %v282, 125
    %v308 = vpop.permute.xlu0 %307
    %309 = vrot.lane.b32.xlu0 %v283, 125
    %v310 = vpop.permute.xlu0 %309
    %vm311 = vcmask 1022976
    %v312 = vsel %vm311, %v294, %v296
    %v313 = vsel %vm311, %v296, %v298
    %v314 = vsel %vm311, %v298, %v300
    %v315 = vsel %vm311, %v300, %v302
    %v316 = vsel %vm311, %v302, %v304
    %v317 = vsel %vm311, %v304, %v306
    %v318 = vsel %vm311, %v306, %v308
    %v319 = vsel %vm311, %v308, %v310
    %v328 = vadd.f32 %v207, %v312
    %v329 = vadd.f32 %v208, %v313
    %v330 = vadd.f32 %v209, %v314
    %v331 = vadd.f32 %v210, %v315
    %v332 = vadd.f32 %v211, %v316
    %v333 = vadd.f32 %v212, %v317
    %v334 = vadd.f32 %v213, %v318
    %v335 = vadd.f32 %v214, %v319
    %v336 = vmul.f32 %v24, 0.01084583
    %v337 = vmul.f32 %v25, 0.01084583
    %v338 = vmul.f32 %v26, 0.01084583
    %v339 = vmul.f32 %v27, 0.01084583
    %v340 = vmul.f32 %v28, 0.01084583
    %v341 = vmul.f32 %v29, 0.01084583
    %v342 = vmul.f32 %v30, 0.01084583
    %v343 = vmul.f32 %v31, 0.01084583
    %v344 = vmul.f32 %v40, 0.01084583
    %354 = vrot.lane.b32.xlu0 %v336, 125
    %v355 = vpop.permute.xlu0 %354
    %356 = vrot.lane.b32.xlu0 %v337, 125
    %v357 = vpop.permute.xlu0 %356
    %358 = vrot.lane.b32.xlu0 %v338, 125
    %v359 = vpop.permute.xlu0 %358
    %360 = vrot.lane.b32.xlu0 %v339, 125
    %v361 = vpop.permute.xlu0 %360
    %362 = vrot.lane.b32.xlu0 %v340, 125
    %v363 = vpop.permute.xlu0 %362
    %364 = vrot.lane.b32.xlu0 %v341, 125
    %v365 = vpop.permute.xlu0 %364
    %366 = vrot.lane.b32.xlu0 %v342, 125
    %v367 = vpop.permute.xlu0 %366
    %368 = vrot.lane.b32.xlu0 %v343, 125
    %v369 = vpop.permute.xlu0 %368
    %370 = vrot.lane.b32.xlu0 %v344, 125
    %v371 = vpop.permute.xlu0 %370
    %v372 = vsel %vm311, %v355, %v357
    %v373 = vsel %vm311, %v357, %v359
    %v374 = vsel %vm311, %v359, %v361
    %v375 = vsel %vm311, %v361, %v363
    %v376 = vsel %vm311, %v363, %v365
    %v377 = vsel %vm311, %v365, %v367
    %v378 = vsel %vm311, %v367, %v369
    %v379 = vsel %vm311, %v369, %v371
    %v388 = vadd.f32 %v267, %v372
    %v389 = vadd.f32 %v268, %v373
    %v390 = vadd.f32 %v269, %v374
    %v391 = vadd.f32 %v270, %v375
    %v392 = vadd.f32 %v271, %v376
    %v393 = vadd.f32 %v272, %v377
    %v394 = vadd.f32 %v273, %v378
    %v395 = vadd.f32 %v274, %v379
    %v396 = vmul.f32 %v24, 0.0050710216
    %v397 = vmul.f32 %v25, 0.0050710216
    %v398 = vmul.f32 %v26, 0.0050710216
    %v399 = vmul.f32 %v27, 0.0050710216
    %v400 = vmul.f32 %v28, 0.0050710216
    %v401 = vmul.f32 %v29, 0.0050710216
    %v402 = vmul.f32 %v30, 0.0050710216
    %v403 = vmul.f32 %v31, 0.0050710216
    %v404 = vmul.f32 %v40, 0.0050710216
    %414 = vrot.lane.b32.xlu0 %v396, 124
    %v415 = vpop.permute.xlu0 %414
    %416 = vrot.lane.b32.xlu0 %v397, 124
    %v417 = vpop.permute.xlu0 %416
    %418 = vrot.lane.b32.xlu0 %v398, 124
    %v419 = vpop.permute.xlu0 %418
    %420 = vrot.lane.b32.xlu0 %v399, 124
    %v421 = vpop.permute.xlu0 %420
    %422 = vrot.lane.b32.xlu0 %v400, 124
    %v423 = vpop.permute.xlu0 %422
    %424 = vrot.lane.b32.xlu0 %v401, 124
    %v425 = vpop.permute.xlu0 %424
    %426 = vrot.lane.b32.xlu0 %v402, 124
    %v427 = vpop.permute.xlu0 %426
    %428 = vrot.lane.b32.xlu0 %v403, 124
    %v429 = vpop.permute.xlu0 %428
    %430 = vrot.lane.b32.xlu0 %v404, 124
    %v431 = vpop.permute.xlu0 %430
    %vm432 = vcmask 1014784
    %v433 = vsel %vm432, %v415, %v417
    %v434 = vsel %vm432, %v417, %v419
    %v435 = vsel %vm432, %v419, %v421
    %v436 = vsel %vm432, %v421, %v423
    %v437 = vsel %vm432, %v423, %v425
    %v438 = vsel %vm432, %v425, %v427
    %v439 = vsel %vm432, %v427, %v429
    %v440 = vsel %vm432, %v429, %v431
    %v449 = vadd.f32 %v328, %v433
    %v450 = vadd.f32 %v329, %v434
    %v451 = vadd.f32 %v330, %v435
    %v452 = vadd.f32 %v331, %v436
    %v453 = vadd.f32 %v332, %v437
    %v454 = vadd.f32 %v333, %v438
    %v455 = vadd.f32 %v334, %v439
    %v456 = vadd.f32 %v335, %v440
    %v457 = vmul.f32 %v24, -0.034302063
    %v458 = vmul.f32 %v25, -0.034302063
    %v459 = vmul.f32 %v26, -0.034302063
    %v460 = vmul.f32 %v27, -0.034302063
    %v461 = vmul.f32 %v28, -0.034302063
    %v462 = vmul.f32 %v29, -0.034302063
    %v463 = vmul.f32 %v30, -0.034302063
    %v464 = vmul.f32 %v31, -0.034302063
    %v465 = vmul.f32 %v40, -0.034302063
    %475 = vrot.lane.b32.xlu0 %v457, 124
    %v476 = vpop.permute.xlu0 %475
    %477 = vrot.lane.b32.xlu0 %v458, 124
    %v478 = vpop.permute.xlu0 %477
    %479 = vrot.lane.b32.xlu0 %v459, 124
    %v480 = vpop.permute.xlu0 %479
    %481 = vrot.lane.b32.xlu0 %v460, 124
    %v482 = vpop.permute.xlu0 %481
    %483 = vrot.lane.b32.xlu0 %v461, 124
    %v484 = vpop.permute.xlu0 %483
    %485 = vrot.lane.b32.xlu0 %v462, 124
    %v486 = vpop.permute.xlu0 %485
    %487 = vrot.lane.b32.xlu0 %v463, 124
    %v488 = vpop.permute.xlu0 %487
    %489 = vrot.lane.b32.xlu0 %v464, 124
    %v490 = vpop.permute.xlu0 %489
    %491 = vrot.lane.b32.xlu0 %v465, 124
    %v492 = vpop.permute.xlu0 %491
    %v493 = vsel %vm432, %v476, %v478
    %v494 = vsel %vm432, %v478, %v480
    %v495 = vsel %vm432, %v480, %v482
    %v496 = vsel %vm432, %v482, %v484
    %v497 = vsel %vm432, %v484, %v486
    %v498 = vsel %vm432, %v486, %v488
    %v499 = vsel %vm432, %v488, %v490
    %v500 = vsel %vm432, %v490, %v492
    %v509 = vadd.f32 %v388, %v493
    %v510 = vadd.f32 %v389, %v494
    %v511 = vadd.f32 %v390, %v495
    %v512 = vadd.f32 %v391, %v496
    %v513 = vadd.f32 %v392, %v497
    %v514 = vadd.f32 %v393, %v498
    %v515 = vadd.f32 %v394, %v499
    %v516 = vadd.f32 %v395, %v500
    %v517 = vmul.f32 %v24, -0.0075402437
    %v518 = vmul.f32 %v25, -0.0075402437
    %v519 = vmul.f32 %v26, -0.0075402437
    %v520 = vmul.f32 %v27, -0.0075402437
    %v521 = vmul.f32 %v28, -0.0075402437
    %v522 = vmul.f32 %v29, -0.0075402437
    %v523 = vmul.f32 %v30, -0.0075402437
    %v524 = vmul.f32 %v31, -0.0075402437
    %v525 = vmul.f32 %v40, -0.0075402437
    %535 = vrot.lane.b32.xlu0 %v517, 123
    %v536 = vpop.permute.xlu0 %535
    %537 = vrot.lane.b32.xlu0 %v518, 123
    %v538 = vpop.permute.xlu0 %537
    %539 = vrot.lane.b32.xlu0 %v519, 123
    %v540 = vpop.permute.xlu0 %539
    %541 = vrot.lane.b32.xlu0 %v520, 123
    %v542 = vpop.permute.xlu0 %541
    %543 = vrot.lane.b32.xlu0 %v521, 123
    %v544 = vpop.permute.xlu0 %543
    %545 = vrot.lane.b32.xlu0 %v522, 123
    %v546 = vpop.permute.xlu0 %545
    %547 = vrot.lane.b32.xlu0 %v523, 123
    %v548 = vpop.permute.xlu0 %547
    %549 = vrot.lane.b32.xlu0 %v524, 123
    %v550 = vpop.permute.xlu0 %549
    %551 = vrot.lane.b32.xlu0 %v525, 123
    %v552 = vpop.permute.xlu0 %551
    %vm553 = vcmask 1006592
    %v554 = vsel %vm553, %v536, %v538
    %v555 = vsel %vm553, %v538, %v540
    %v556 = vsel %vm553, %v540, %v542
    %v557 = vsel %vm553, %v542, %v544
    %v558 = vsel %vm553, %v544, %v546
    %v559 = vsel %vm553, %v546, %v548
    %v560 = vsel %vm553, %v548, %v550
    %v561 = vsel %vm553, %v550, %v552
    %v570 = vadd.f32 %v449, %v554
    %v571 = vadd.f32 %v450, %v555
    %v572 = vadd.f32 %v451, %v556
    %v573 = vadd.f32 %v452, %v557
    %v574 = vadd.f32 %v453, %v558
    %v575 = vadd.f32 %v454, %v559
    %v576 = vadd.f32 %v455, %v560
    %v577 = vadd.f32 %v456, %v561
    %v578 = vmul.f32 %v24, 0.080692895
    %v579 = vmul.f32 %v25, 0.080692895
    %v580 = vmul.f32 %v26, 0.080692895
    %v581 = vmul.f32 %v27, 0.080692895
    %v582 = vmul.f32 %v28, 0.080692895
    %v583 = vmul.f32 %v29, 0.080692895
    %v584 = vmul.f32 %v30, 0.080692895
    %v585 = vmul.f32 %v31, 0.080692895
    %v586 = vmul.f32 %v40, 0.080692895
    %596 = vrot.lane.b32.xlu0 %v578, 123
    %v597 = vpop.permute.xlu0 %596
    %598 = vrot.lane.b32.xlu0 %v579, 123
    %v599 = vpop.permute.xlu0 %598
    %600 = vrot.lane.b32.xlu0 %v580, 123
    %v601 = vpop.permute.xlu0 %600
    %602 = vrot.lane.b32.xlu0 %v581, 123
    %v603 = vpop.permute.xlu0 %602
    %604 = vrot.lane.b32.xlu0 %v582, 123
    %v605 = vpop.permute.xlu0 %604
    %606 = vrot.lane.b32.xlu0 %v583, 123
    %v607 = vpop.permute.xlu0 %606
    %608 = vrot.lane.b32.xlu0 %v584, 123
    %v609 = vpop.permute.xlu0 %608
    %610 = vrot.lane.b32.xlu0 %v585, 123
    %v611 = vpop.permute.xlu0 %610
    %612 = vrot.lane.b32.xlu0 %v586, 123
    %v613 = vpop.permute.xlu0 %612
    %v614 = vsel %vm553, %v597, %v599
    %v615 = vsel %vm553, %v599, %v601
    %v616 = vsel %vm553, %v601, %v603
    %v617 = vsel %vm553, %v603, %v605
    %v618 = vsel %vm553, %v605, %v607
    %v619 = vsel %vm553, %v607, %v609
    %v620 = vsel %vm553, %v609, %v611
    %v621 = vsel %vm553, %v611, %v613
    %v630 = vadd.f32 %v509, %v614
    %v631 = vadd.f32 %v510, %v615
    %v632 = vadd.f32 %v511, %v616
    %v633 = vadd.f32 %v512, %v617
    %v634 = vadd.f32 %v513, %v618
    %v635 = vadd.f32 %v514, %v619
    %v636 = vadd.f32 %v515, %v620
    %v637 = vadd.f32 %v516, %v621
    %v638 = vmul.f32 %v24, 0.009341621
    %v639 = vmul.f32 %v25, 0.009341621
    %v640 = vmul.f32 %v26, 0.009341621
    %v641 = vmul.f32 %v27, 0.009341621
    %v642 = vmul.f32 %v28, 0.009341621
    %v643 = vmul.f32 %v29, 0.009341621
    %v644 = vmul.f32 %v30, 0.009341621
    %v645 = vmul.f32 %v31, 0.009341621
    %v646 = vmul.f32 %v40, 0.009341621
    %656 = vrot.lane.b32.xlu0 %v638, 122
    %v657 = vpop.permute.xlu0 %656
    %658 = vrot.lane.b32.xlu0 %v639, 122
    %v659 = vpop.permute.xlu0 %658
    %660 = vrot.lane.b32.xlu0 %v640, 122
    %v661 = vpop.permute.xlu0 %660
    %662 = vrot.lane.b32.xlu0 %v641, 122
    %v663 = vpop.permute.xlu0 %662
    %664 = vrot.lane.b32.xlu0 %v642, 122
    %v665 = vpop.permute.xlu0 %664
    %666 = vrot.lane.b32.xlu0 %v643, 122
    %v667 = vpop.permute.xlu0 %666
    %668 = vrot.lane.b32.xlu0 %v644, 122
    %v669 = vpop.permute.xlu0 %668
    %670 = vrot.lane.b32.xlu0 %v645, 122
    %v671 = vpop.permute.xlu0 %670
    %672 = vrot.lane.b32.xlu0 %v646, 122
    %v673 = vpop.permute.xlu0 %672
    %vm674 = vcmask 998400
    %v675 = vsel %vm674, %v657, %v659
    %v676 = vsel %vm674, %v659, %v661
    %v677 = vsel %vm674, %v661, %v663
    %v678 = vsel %vm674, %v663, %v665
    %v679 = vsel %vm674, %v665, %v667
    %v680 = vsel %vm674, %v667, %v669
    %v681 = vsel %vm674, %v669, %v671
    %v682 = vsel %vm674, %v671, %v673
    %v691 = vadd.f32 %v570, %v675
    %v692 = vadd.f32 %v571, %v676
    %v693 = vadd.f32 %v572, %v677
    %v694 = vadd.f32 %v573, %v678
    %v695 = vadd.f32 %v574, %v679
    %v696 = vadd.f32 %v575, %v680
    %v697 = vadd.f32 %v576, %v681
    %v698 = vadd.f32 %v577, %v682
    %v699 = vmul.f32 %v24, -0.18151486
    %v700 = vmul.f32 %v25, -0.18151486
    %v701 = vmul.f32 %v26, -0.18151486
    %v702 = vmul.f32 %v27, -0.18151486
    %v703 = vmul.f32 %v28, -0.18151486
    %v704 = vmul.f32 %v29, -0.18151486
    %v705 = vmul.f32 %v30, -0.18151486
    %v706 = vmul.f32 %v31, -0.18151486
    %v707 = vmul.f32 %v40, -0.18151486
    %717 = vrot.lane.b32.xlu0 %v699, 122
    %v718 = vpop.permute.xlu0 %717
    %719 = vrot.lane.b32.xlu0 %v700, 122
    %v720 = vpop.permute.xlu0 %719
    %721 = vrot.lane.b32.xlu0 %v701, 122
    %v722 = vpop.permute.xlu0 %721
    %723 = vrot.lane.b32.xlu0 %v702, 122
    %v724 = vpop.permute.xlu0 %723
    %725 = vrot.lane.b32.xlu0 %v703, 122
    %v726 = vpop.permute.xlu0 %725
    %727 = vrot.lane.b32.xlu0 %v704, 122
    %v728 = vpop.permute.xlu0 %727
    %729 = vrot.lane.b32.xlu0 %v705, 122
    %v730 = vpop.permute.xlu0 %729
    %731 = vrot.lane.b32.xlu0 %v706, 122
    %v732 = vpop.permute.xlu0 %731
    %733 = vrot.lane.b32.xlu0 %v707, 122
    %v734 = vpop.permute.xlu0 %733
    %v735 = vsel %vm674, %v718, %v720
    %v736 = vsel %vm674, %v720, %v722
    %v737 = vsel %vm674, %v722, %v724
    %v738 = vsel %vm674, %v724, %v726
    %v739 = vsel %vm674, %v726, %v728
    %v740 = vsel %vm674, %v728, %v730
    %v741 = vsel %vm674, %v730, %v732
    %v742 = vsel %vm674, %v732, %v734
    %v751 = vadd.f32 %v630, %v735
    %v752 = vadd.f32 %v631, %v736
    %v753 = vadd.f32 %v632, %v737
    %v754 = vadd.f32 %v633, %v738
    %v755 = vadd.f32 %v634, %v739
    %v756 = vadd.f32 %v635, %v740
    %v757 = vadd.f32 %v636, %v741
    %v758 = vadd.f32 %v637, %v742
    %v759 = vmul.f32 %v24, 0.99
    %v760 = vmul.f32 %v25, 0.99
    %v761 = vmul.f32 %v26, 0.99
    %v762 = vmul.f32 %v27, 0.99
    %v763 = vmul.f32 %v28, 0.99
    %v764 = vmul.f32 %v29, 0.99
    %v765 = vmul.f32 %v30, 0.99
    %v766 = vmul.f32 %v31, 0.99
    %v767 = vmul.f32 %v40, 0.99
    %777 = vrot.lane.b32.xlu0 %v759, 121
    %v778 = vpop.permute.xlu0 %777
    %779 = vrot.lane.b32.xlu0 %v760, 121
    %v780 = vpop.permute.xlu0 %779
    %781 = vrot.lane.b32.xlu0 %v761, 121
    %v782 = vpop.permute.xlu0 %781
    %783 = vrot.lane.b32.xlu0 %v762, 121
    %v784 = vpop.permute.xlu0 %783
    %785 = vrot.lane.b32.xlu0 %v763, 121
    %v786 = vpop.permute.xlu0 %785
    %787 = vrot.lane.b32.xlu0 %v764, 121
    %v788 = vpop.permute.xlu0 %787
    %789 = vrot.lane.b32.xlu0 %v765, 121
    %v790 = vpop.permute.xlu0 %789
    %791 = vrot.lane.b32.xlu0 %v766, 121
    %v792 = vpop.permute.xlu0 %791
    %793 = vrot.lane.b32.xlu0 %v767, 121
    %v794 = vpop.permute.xlu0 %793
    %vm795 = vcmask 990208
    %v796 = vsel %vm795, %v778, %v780
    %v797 = vsel %vm795, %v780, %v782
    %v798 = vsel %vm795, %v782, %v784
    %v799 = vsel %vm795, %v784, %v786
    %v800 = vsel %vm795, %v786, %v788
    %v801 = vsel %vm795, %v788, %v790
    %v802 = vsel %vm795, %v790, %v792
    %v803 = vsel %vm795, %v792, %v794
    %v812 = vadd.f32 %v691, %v796
    %v813 = vadd.f32 %v692, %v797
    %v814 = vadd.f32 %v693, %v798
    %v815 = vadd.f32 %v694, %v799
    %v816 = vadd.f32 %v695, %v800
    %v817 = vadd.f32 %v696, %v801
    %v818 = vadd.f32 %v697, %v802
    %v819 = vadd.f32 %v698, %v803
    %v820 = vmul.f32 %v24, 0.62591106
    %v821 = vmul.f32 %v25, 0.62591106
    %v822 = vmul.f32 %v26, 0.62591106
    %v823 = vmul.f32 %v27, 0.62591106
    %v824 = vmul.f32 %v28, 0.62591106
    %v825 = vmul.f32 %v29, 0.62591106
    %v826 = vmul.f32 %v30, 0.62591106
    %v827 = vmul.f32 %v31, 0.62591106
    %v828 = vmul.f32 %v40, 0.62591106
    %838 = vrot.lane.b32.xlu0 %v820, 121
    %v839 = vpop.permute.xlu0 %838
    %840 = vrot.lane.b32.xlu0 %v821, 121
    %v841 = vpop.permute.xlu0 %840
    %842 = vrot.lane.b32.xlu0 %v822, 121
    %v843 = vpop.permute.xlu0 %842
    %844 = vrot.lane.b32.xlu0 %v823, 121
    %v845 = vpop.permute.xlu0 %844
    %846 = vrot.lane.b32.xlu0 %v824, 121
    %v847 = vpop.permute.xlu0 %846
    %848 = vrot.lane.b32.xlu0 %v825, 121
    %v849 = vpop.permute.xlu0 %848
    %850 = vrot.lane.b32.xlu0 %v826, 121
    %v851 = vpop.permute.xlu0 %850
    %852 = vrot.lane.b32.xlu0 %v827, 121
    %v853 = vpop.permute.xlu0 %852
    %854 = vrot.lane.b32.xlu0 %v828, 121
    %v855 = vpop.permute.xlu0 %854
    %v856 = vsel %vm795, %v839, %v841
    %v857 = vsel %vm795, %v841, %v843
    %v858 = vsel %vm795, %v843, %v845
    %v859 = vsel %vm795, %v845, %v847
    %v860 = vsel %vm795, %v847, %v849
    %v861 = vsel %vm795, %v849, %v851
    %v862 = vsel %vm795, %v851, %v853
    %v863 = vsel %vm795, %v853, %v855
    %v872 = vadd.f32 %v751, %v856
    %v873 = vadd.f32 %v752, %v857
    %v874 = vadd.f32 %v753, %v858
    %v875 = vadd.f32 %v754, %v859
    %v876 = vadd.f32 %v755, %v860
    %v877 = vadd.f32 %v756, %v861
    %v878 = vadd.f32 %v757, %v862
    %v879 = vadd.f32 %v758, %v863
    %880 = vrot.lane.b32.xlu0 %v638, 120
    %v881 = vpop.permute.xlu0 %880
    %882 = vrot.lane.b32.xlu0 %v639, 120
    %v883 = vpop.permute.xlu0 %882
    %884 = vrot.lane.b32.xlu0 %v640, 120
    %v885 = vpop.permute.xlu0 %884
    %886 = vrot.lane.b32.xlu0 %v641, 120
    %v887 = vpop.permute.xlu0 %886
    %888 = vrot.lane.b32.xlu0 %v642, 120
    %v889 = vpop.permute.xlu0 %888
    %890 = vrot.lane.b32.xlu0 %v643, 120
    %v891 = vpop.permute.xlu0 %890
    %892 = vrot.lane.b32.xlu0 %v644, 120
    %v893 = vpop.permute.xlu0 %892
    %894 = vrot.lane.b32.xlu0 %v645, 120
    %v895 = vpop.permute.xlu0 %894
    %896 = vrot.lane.b32.xlu0 %v646, 120
    %v897 = vpop.permute.xlu0 %896
    %vm898 = vcmask 982016
    %v899 = vsel %vm898, %v881, %v883
    %v900 = vsel %vm898, %v883, %v885
    %v901 = vsel %vm898, %v885, %v887
    %v902 = vsel %vm898, %v887, %v889
    %v903 = vsel %vm898, %v889, %v891
    %v904 = vsel %vm898, %v891, %v893
    %v905 = vsel %vm898, %v893, %v895
    %v906 = vsel %vm898, %v895, %v897
    %v915 = vadd.f32 %v812, %v899
    %v916 = vadd.f32 %v813, %v900
    %v917 = vadd.f32 %v814, %v901
    %v918 = vadd.f32 %v815, %v902
    %v919 = vadd.f32 %v816, %v903
    %v920 = vadd.f32 %v817, %v904
    %v921 = vadd.f32 %v818, %v905
    %v922 = vadd.f32 %v819, %v906
    %923 = vrot.lane.b32.xlu0 %v820, 120
    %v924 = vpop.permute.xlu0 %923
    %925 = vrot.lane.b32.xlu0 %v821, 120
    %v926 = vpop.permute.xlu0 %925
    %927 = vrot.lane.b32.xlu0 %v822, 120
    %v928 = vpop.permute.xlu0 %927
    %929 = vrot.lane.b32.xlu0 %v823, 120
    %v930 = vpop.permute.xlu0 %929
    %931 = vrot.lane.b32.xlu0 %v824, 120
    %v932 = vpop.permute.xlu0 %931
    %933 = vrot.lane.b32.xlu0 %v825, 120
    %v934 = vpop.permute.xlu0 %933
    %935 = vrot.lane.b32.xlu0 %v826, 120
    %v936 = vpop.permute.xlu0 %935
    %937 = vrot.lane.b32.xlu0 %v827, 120
    %v938 = vpop.permute.xlu0 %937
    %939 = vrot.lane.b32.xlu0 %v828, 120
    %v940 = vpop.permute.xlu0 %939
    %v941 = vsel %vm898, %v924, %v926
    %v942 = vsel %vm898, %v926, %v928
    %v943 = vsel %vm898, %v928, %v930
    %v944 = vsel %vm898, %v930, %v932
    %v945 = vsel %vm898, %v932, %v934
    %v946 = vsel %vm898, %v934, %v936
    %v947 = vsel %vm898, %v936, %v938
    %v948 = vsel %vm898, %v938, %v940
    %v957 = vadd.f32 %v872, %v941
    %v958 = vadd.f32 %v873, %v942
    %v959 = vadd.f32 %v874, %v943
    %v960 = vadd.f32 %v875, %v944
    %v961 = vadd.f32 %v876, %v945
    %v962 = vadd.f32 %v877, %v946
    %v963 = vadd.f32 %v878, %v947
    %v964 = vadd.f32 %v879, %v948
    %965 = vrot.lane.b32.xlu0 %v517, 119
    %v966 = vpop.permute.xlu0 %965
    %967 = vrot.lane.b32.xlu0 %v518, 119
    %v968 = vpop.permute.xlu0 %967
    %969 = vrot.lane.b32.xlu0 %v519, 119
    %v970 = vpop.permute.xlu0 %969
    %971 = vrot.lane.b32.xlu0 %v520, 119
    %v972 = vpop.permute.xlu0 %971
    %973 = vrot.lane.b32.xlu0 %v521, 119
    %v974 = vpop.permute.xlu0 %973
    %975 = vrot.lane.b32.xlu0 %v522, 119
    %v976 = vpop.permute.xlu0 %975
    %977 = vrot.lane.b32.xlu0 %v523, 119
    %v978 = vpop.permute.xlu0 %977
    %979 = vrot.lane.b32.xlu0 %v524, 119
    %v980 = vpop.permute.xlu0 %979
    %981 = vrot.lane.b32.xlu0 %v525, 119
    %v982 = vpop.permute.xlu0 %981
    %vm983 = vcmask 973824
    %v984 = vsel %vm983, %v966, %v968
    %v985 = vsel %vm983, %v968, %v970
    %v986 = vsel %vm983, %v970, %v972
    %v987 = vsel %vm983, %v972, %v974
    %v988 = vsel %vm983, %v974, %v976
    %v989 = vsel %vm983, %v976, %v978
    %v990 = vsel %vm983, %v978, %v980
    %v991 = vsel %vm983, %v980, %v982
    %v1000 = vadd.f32 %v915, %v984
    %v1001 = vadd.f32 %v916, %v985
    %v1002 = vadd.f32 %v917, %v986
    %v1003 = vadd.f32 %v918, %v987
    %v1004 = vadd.f32 %v919, %v988
    %v1005 = vadd.f32 %v920, %v989
    %v1006 = vadd.f32 %v921, %v990
    %v1007 = vadd.f32 %v922, %v991
    %1008 = vrot.lane.b32.xlu0 %v699, 119
    %v1009 = vpop.permute.xlu0 %1008
    %1010 = vrot.lane.b32.xlu0 %v700, 119
    %v1011 = vpop.permute.xlu0 %1010
    %1012 = vrot.lane.b32.xlu0 %v701, 119
    %v1013 = vpop.permute.xlu0 %1012
    %1014 = vrot.lane.b32.xlu0 %v702, 119
    %v1015 = vpop.permute.xlu0 %1014
    %1016 = vrot.lane.b32.xlu0 %v703, 119
    %v1017 = vpop.permute.xlu0 %1016
    %1018 = vrot.lane.b32.xlu0 %v704, 119
    %v1019 = vpop.permute.xlu0 %1018
    %1020 = vrot.lane.b32.xlu0 %v705, 119
    %v1021 = vpop.permute.xlu0 %1020
    %1022 = vrot.lane.b32.xlu0 %v706, 119
    %v1023 = vpop.permute.xlu0 %1022
    %1024 = vrot.lane.b32.xlu0 %v707, 119
    %v1025 = vpop.permute.xlu0 %1024
    %v1026 = vsel %vm983, %v1009, %v1011
    %v1027 = vsel %vm983, %v1011, %v1013
    %v1028 = vsel %vm983, %v1013, %v1015
    %v1029 = vsel %vm983, %v1015, %v1017
    %v1030 = vsel %vm983, %v1017, %v1019
    %v1031 = vsel %vm983, %v1019, %v1021
    %v1032 = vsel %vm983, %v1021, %v1023
    %v1033 = vsel %vm983, %v1023, %v1025
    %v1042 = vadd.f32 %v957, %v1026
    %v1043 = vadd.f32 %v958, %v1027
    %v1044 = vadd.f32 %v959, %v1028
    %v1045 = vadd.f32 %v960, %v1029
    %v1046 = vadd.f32 %v961, %v1030
    %v1047 = vadd.f32 %v962, %v1031
    %v1048 = vadd.f32 %v963, %v1032
    %v1049 = vadd.f32 %v964, %v1033
    %1050 = vrot.lane.b32.xlu0 %v396, 118
    %v1051 = vpop.permute.xlu0 %1050
    %1052 = vrot.lane.b32.xlu0 %v397, 118
    %v1053 = vpop.permute.xlu0 %1052
    %1054 = vrot.lane.b32.xlu0 %v398, 118
    %v1055 = vpop.permute.xlu0 %1054
    %1056 = vrot.lane.b32.xlu0 %v399, 118
    %v1057 = vpop.permute.xlu0 %1056
    %1058 = vrot.lane.b32.xlu0 %v400, 118
    %v1059 = vpop.permute.xlu0 %1058
    %1060 = vrot.lane.b32.xlu0 %v401, 118
    %v1061 = vpop.permute.xlu0 %1060
    %1062 = vrot.lane.b32.xlu0 %v402, 118
    %v1063 = vpop.permute.xlu0 %1062
    %1064 = vrot.lane.b32.xlu0 %v403, 118
    %v1065 = vpop.permute.xlu0 %1064
    %1066 = vrot.lane.b32.xlu0 %v404, 118
    %v1067 = vpop.permute.xlu0 %1066
    %vm1068 = vcmask 965632
    %v1069 = vsel %vm1068, %v1051, %v1053
    %v1070 = vsel %vm1068, %v1053, %v1055
    %v1071 = vsel %vm1068, %v1055, %v1057
    %v1072 = vsel %vm1068, %v1057, %v1059
    %v1073 = vsel %vm1068, %v1059, %v1061
    %v1074 = vsel %vm1068, %v1061, %v1063
    %v1075 = vsel %vm1068, %v1063, %v1065
    %v1076 = vsel %vm1068, %v1065, %v1067
    %v1085 = vadd.f32 %v1000, %v1069
    %v1086 = vadd.f32 %v1001, %v1070
    %v1087 = vadd.f32 %v1002, %v1071
    %v1088 = vadd.f32 %v1003, %v1072
    %v1089 = vadd.f32 %v1004, %v1073
    %v1090 = vadd.f32 %v1005, %v1074
    %v1091 = vadd.f32 %v1006, %v1075
    %v1092 = vadd.f32 %v1007, %v1076
    %1093 = vrot.lane.b32.xlu0 %v578, 118
    %v1094 = vpop.permute.xlu0 %1093
    %1095 = vrot.lane.b32.xlu0 %v579, 118
    %v1096 = vpop.permute.xlu0 %1095
    %1097 = vrot.lane.b32.xlu0 %v580, 118
    %v1098 = vpop.permute.xlu0 %1097
    %1099 = vrot.lane.b32.xlu0 %v581, 118
    %v1100 = vpop.permute.xlu0 %1099
    %1101 = vrot.lane.b32.xlu0 %v582, 118
    %v1102 = vpop.permute.xlu0 %1101
    %1103 = vrot.lane.b32.xlu0 %v583, 118
    %v1104 = vpop.permute.xlu0 %1103
    %1105 = vrot.lane.b32.xlu0 %v584, 118
    %v1106 = vpop.permute.xlu0 %1105
    %1107 = vrot.lane.b32.xlu0 %v585, 118
    %v1108 = vpop.permute.xlu0 %1107
    %1109 = vrot.lane.b32.xlu0 %v586, 118
    %v1110 = vpop.permute.xlu0 %1109
    %v1111 = vsel %vm1068, %v1094, %v1096
    %v1112 = vsel %vm1068, %v1096, %v1098
    %v1113 = vsel %vm1068, %v1098, %v1100
    %v1114 = vsel %vm1068, %v1100, %v1102
    %v1115 = vsel %vm1068, %v1102, %v1104
    %v1116 = vsel %vm1068, %v1104, %v1106
    %v1117 = vsel %vm1068, %v1106, %v1108
    %v1118 = vsel %vm1068, %v1108, %v1110
    %v1127 = vadd.f32 %v1042, %v1111
    %v1128 = vadd.f32 %v1043, %v1112
    %v1129 = vadd.f32 %v1044, %v1113
    %v1130 = vadd.f32 %v1045, %v1114
    %v1131 = vadd.f32 %v1046, %v1115
    %v1132 = vadd.f32 %v1047, %v1116
    %v1133 = vadd.f32 %v1048, %v1117
    %v1134 = vadd.f32 %v1049, %v1118
    %1135 = vrot.lane.b32.xlu0 %v275, 117
    %v1136 = vpop.permute.xlu0 %1135
    %1137 = vrot.lane.b32.xlu0 %v276, 117
    %v1138 = vpop.permute.xlu0 %1137
    %1139 = vrot.lane.b32.xlu0 %v277, 117
    %v1140 = vpop.permute.xlu0 %1139
    %1141 = vrot.lane.b32.xlu0 %v278, 117
    %v1142 = vpop.permute.xlu0 %1141
    %1143 = vrot.lane.b32.xlu0 %v279, 117
    %v1144 = vpop.permute.xlu0 %1143
    %1145 = vrot.lane.b32.xlu0 %v280, 117
    %v1146 = vpop.permute.xlu0 %1145
    %1147 = vrot.lane.b32.xlu0 %v281, 117
    %v1148 = vpop.permute.xlu0 %1147
    %1149 = vrot.lane.b32.xlu0 %v282, 117
    %v1150 = vpop.permute.xlu0 %1149
    %1151 = vrot.lane.b32.xlu0 %v283, 117
    %v1152 = vpop.permute.xlu0 %1151
    %vm1153 = vcmask 957440
    %v1154 = vsel %vm1153, %v1136, %v1138
    %v1155 = vsel %vm1153, %v1138, %v1140
    %v1156 = vsel %vm1153, %v1140, %v1142
    %v1157 = vsel %vm1153, %v1142, %v1144
    %v1158 = vsel %vm1153, %v1144, %v1146
    %v1159 = vsel %vm1153, %v1146, %v1148
    %v1160 = vsel %vm1153, %v1148, %v1150
    %v1161 = vsel %vm1153, %v1150, %v1152
    %v1170 = vadd.f32 %v1085, %v1154
    %v1171 = vadd.f32 %v1086, %v1155
    %v1172 = vadd.f32 %v1087, %v1156
    %v1173 = vadd.f32 %v1088, %v1157
    %v1174 = vadd.f32 %v1089, %v1158
    %v1175 = vadd.f32 %v1090, %v1159
    %v1176 = vadd.f32 %v1091, %v1160
    %v1177 = vadd.f32 %v1092, %v1161
    %1178 = vrot.lane.b32.xlu0 %v457, 117
    %v1179 = vpop.permute.xlu0 %1178
    %1180 = vrot.lane.b32.xlu0 %v458, 117
    %v1181 = vpop.permute.xlu0 %1180
    %1182 = vrot.lane.b32.xlu0 %v459, 117
    %v1183 = vpop.permute.xlu0 %1182
    %1184 = vrot.lane.b32.xlu0 %v460, 117
    %v1185 = vpop.permute.xlu0 %1184
    %1186 = vrot.lane.b32.xlu0 %v461, 117
    %v1187 = vpop.permute.xlu0 %1186
    %1188 = vrot.lane.b32.xlu0 %v462, 117
    %v1189 = vpop.permute.xlu0 %1188
    %1190 = vrot.lane.b32.xlu0 %v463, 117
    %v1191 = vpop.permute.xlu0 %1190
    %1192 = vrot.lane.b32.xlu0 %v464, 117
    %v1193 = vpop.permute.xlu0 %1192
    %1194 = vrot.lane.b32.xlu0 %v465, 117
    %v1195 = vpop.permute.xlu0 %1194
    %v1196 = vsel %vm1153, %v1179, %v1181
    %v1197 = vsel %vm1153, %v1181, %v1183
    %v1198 = vsel %vm1153, %v1183, %v1185
    %v1199 = vsel %vm1153, %v1185, %v1187
    %v1200 = vsel %vm1153, %v1187, %v1189
    %v1201 = vsel %vm1153, %v1189, %v1191
    %v1202 = vsel %vm1153, %v1191, %v1193
    %v1203 = vsel %vm1153, %v1193, %v1195
    %v1212 = vadd.f32 %v1127, %v1196
    %v1213 = vadd.f32 %v1128, %v1197
    %v1214 = vadd.f32 %v1129, %v1198
    %v1215 = vadd.f32 %v1130, %v1199
    %v1216 = vadd.f32 %v1131, %v1200
    %v1217 = vadd.f32 %v1132, %v1201
    %v1218 = vadd.f32 %v1133, %v1202
    %v1219 = vadd.f32 %v1134, %v1203
    %1220 = vrot.lane.b32.xlu0 %v154, 116
    %v1221 = vpop.permute.xlu0 %1220
    %1222 = vrot.lane.b32.xlu0 %v155, 116
    %v1223 = vpop.permute.xlu0 %1222
    %1224 = vrot.lane.b32.xlu0 %v156, 116
    %v1225 = vpop.permute.xlu0 %1224
    %1226 = vrot.lane.b32.xlu0 %v157, 116
    %v1227 = vpop.permute.xlu0 %1226
    %1228 = vrot.lane.b32.xlu0 %v158, 116
    %v1229 = vpop.permute.xlu0 %1228
    %1230 = vrot.lane.b32.xlu0 %v159, 116
    %v1231 = vpop.permute.xlu0 %1230
    %1232 = vrot.lane.b32.xlu0 %v160, 116
    %v1233 = vpop.permute.xlu0 %1232
    %1234 = vrot.lane.b32.xlu0 %v161, 116
    %v1235 = vpop.permute.xlu0 %1234
    %1236 = vrot.lane.b32.xlu0 %v162, 116
    %v1237 = vpop.permute.xlu0 %1236
    %vm1238 = vcmask 949248
    %v1239 = vsel %vm1238, %v1221, %v1223
    %v1240 = vsel %vm1238, %v1223, %v1225
    %v1241 = vsel %vm1238, %v1225, %v1227
    %v1242 = vsel %vm1238, %v1227, %v1229
    %v1243 = vsel %vm1238, %v1229, %v1231
    %v1244 = vsel %vm1238, %v1231, %v1233
    %v1245 = vsel %vm1238, %v1233, %v1235
    %v1246 = vsel %vm1238, %v1235, %v1237
    %v1255 = vadd.f32 %v1170, %v1239
    %v1256 = vadd.f32 %v1171, %v1240
    %v1257 = vadd.f32 %v1172, %v1241
    %v1258 = vadd.f32 %v1173, %v1242
    %v1259 = vadd.f32 %v1174, %v1243
    %v1260 = vadd.f32 %v1175, %v1244
    %v1261 = vadd.f32 %v1176, %v1245
    %v1262 = vadd.f32 %v1177, %v1246
    %1263 = vrot.lane.b32.xlu0 %v336, 116
    %v1264 = vpop.permute.xlu0 %1263
    %1265 = vrot.lane.b32.xlu0 %v337, 116
    %v1266 = vpop.permute.xlu0 %1265
    %1267 = vrot.lane.b32.xlu0 %v338, 116
    %v1268 = vpop.permute.xlu0 %1267
    %1269 = vrot.lane.b32.xlu0 %v339, 116
    %v1270 = vpop.permute.xlu0 %1269
    %1271 = vrot.lane.b32.xlu0 %v340, 116
    %v1272 = vpop.permute.xlu0 %1271
    %1273 = vrot.lane.b32.xlu0 %v341, 116
    %v1274 = vpop.permute.xlu0 %1273
    %1275 = vrot.lane.b32.xlu0 %v342, 116
    %v1276 = vpop.permute.xlu0 %1275
    %1277 = vrot.lane.b32.xlu0 %v343, 116
    %v1278 = vpop.permute.xlu0 %1277
    %1279 = vrot.lane.b32.xlu0 %v344, 116
    %v1280 = vpop.permute.xlu0 %1279
    %v1281 = vsel %vm1238, %v1264, %v1266
    %v1282 = vsel %vm1238, %v1266, %v1268
    %v1283 = vsel %vm1238, %v1268, %v1270
    %v1284 = vsel %vm1238, %v1270, %v1272
    %v1285 = vsel %vm1238, %v1272, %v1274
    %v1286 = vsel %vm1238, %v1274, %v1276
    %v1287 = vsel %vm1238, %v1276, %v1278
    %v1288 = vsel %vm1238, %v1278, %v1280
    %v1297 = vadd.f32 %v1212, %v1281
    %v1298 = vadd.f32 %v1213, %v1282
    %v1299 = vadd.f32 %v1214, %v1283
    %v1300 = vadd.f32 %v1215, %v1284
    %v1301 = vadd.f32 %v1216, %v1285
    %v1302 = vadd.f32 %v1217, %v1286
    %v1303 = vadd.f32 %v1218, %v1287
    %v1304 = vadd.f32 %v1219, %v1288
    %1305 = vrot.lane.b32.xlu0 %v41, 115
    %v1306 = vpop.permute.xlu0 %1305
    %1307 = vrot.lane.b32.xlu0 %v42, 115
    %v1308 = vpop.permute.xlu0 %1307
    %1309 = vrot.lane.b32.xlu0 %v43, 115
    %v1310 = vpop.permute.xlu0 %1309
    %1311 = vrot.lane.b32.xlu0 %v44, 115
    %v1312 = vpop.permute.xlu0 %1311
    %1313 = vrot.lane.b32.xlu0 %v45, 115
    %v1314 = vpop.permute.xlu0 %1313
    %1315 = vrot.lane.b32.xlu0 %v46, 115
    %v1316 = vpop.permute.xlu0 %1315
    %1317 = vrot.lane.b32.xlu0 %v47, 115
    %v1318 = vpop.permute.xlu0 %1317
    %1319 = vrot.lane.b32.xlu0 %v48, 115
    %v1320 = vpop.permute.xlu0 %1319
    %1321 = vrot.lane.b32.xlu0 %v49, 115
    %v1322 = vpop.permute.xlu0 %1321
    %vm1323 = vcmask 941056
    %v1324 = vsel %vm1323, %v1306, %v1308
    %v1325 = vsel %vm1323, %v1308, %v1310
    %v1326 = vsel %vm1323, %v1310, %v1312
    %v1327 = vsel %vm1323, %v1312, %v1314
    %v1328 = vsel %vm1323, %v1314, %v1316
    %v1329 = vsel %vm1323, %v1316, %v1318
    %v1330 = vsel %vm1323, %v1318, %v1320
    %v1331 = vsel %vm1323, %v1320, %v1322
    %v1340 = vadd.f32 %v1255, %v1324
    %v1341 = vadd.f32 %v1256, %v1325
    %v1342 = vadd.f32 %v1257, %v1326
    %v1343 = vadd.f32 %v1258, %v1327
    %v1344 = vadd.f32 %v1259, %v1328
    %v1345 = vadd.f32 %v1260, %v1329
    %v1346 = vadd.f32 %v1261, %v1330
    %v1347 = vadd.f32 %v1262, %v1331
    %1348 = vrot.lane.b32.xlu0 %v215, 115
    %v1349 = vpop.permute.xlu0 %1348
    %1350 = vrot.lane.b32.xlu0 %v216, 115
    %v1351 = vpop.permute.xlu0 %1350
    %1352 = vrot.lane.b32.xlu0 %v217, 115
    %v1353 = vpop.permute.xlu0 %1352
    %1354 = vrot.lane.b32.xlu0 %v218, 115
    %v1355 = vpop.permute.xlu0 %1354
    %1356 = vrot.lane.b32.xlu0 %v219, 115
    %v1357 = vpop.permute.xlu0 %1356
    %1358 = vrot.lane.b32.xlu0 %v220, 115
    %v1359 = vpop.permute.xlu0 %1358
    %1360 = vrot.lane.b32.xlu0 %v221, 115
    %v1361 = vpop.permute.xlu0 %1360
    %1362 = vrot.lane.b32.xlu0 %v222, 115
    %v1363 = vpop.permute.xlu0 %1362
    %1364 = vrot.lane.b32.xlu0 %v223, 115
    %v1365 = vpop.permute.xlu0 %1364
    %v1366 = vsel %vm1323, %v1349, %v1351
    %v1367 = vsel %vm1323, %v1351, %v1353
    %v1368 = vsel %vm1323, %v1353, %v1355
    %v1369 = vsel %vm1323, %v1355, %v1357
    %v1370 = vsel %vm1323, %v1357, %v1359
    %v1371 = vsel %vm1323, %v1359, %v1361
    %v1372 = vsel %vm1323, %v1361, %v1363
    %v1373 = vsel %vm1323, %v1363, %v1365
    %v1382 = vadd.f32 %v1297, %v1366
    %v1383 = vadd.f32 %v1298, %v1367
    %v1384 = vadd.f32 %v1299, %v1368
    %v1385 = vadd.f32 %v1300, %v1369
    %v1386 = vadd.f32 %v1301, %v1370
    %v1387 = vadd.f32 %v1302, %v1371
    %v1388 = vadd.f32 %v1303, %v1372
    %v1389 = vadd.f32 %v1304, %v1373
    %1390 = vrot.lane.b32.xlu0 %v32, 114
    %v1391 = vpop.permute.xlu0 %1390
    %1392 = vrot.lane.b32.xlu0 %v33, 114
    %v1393 = vpop.permute.xlu0 %1392
    %1394 = vrot.lane.b32.xlu0 %v34, 114
    %v1395 = vpop.permute.xlu0 %1394
    %1396 = vrot.lane.b32.xlu0 %v35, 114
    %v1397 = vpop.permute.xlu0 %1396
    %1398 = vrot.lane.b32.xlu0 %v36, 114
    %v1399 = vpop.permute.xlu0 %1398
    %1400 = vrot.lane.b32.xlu0 %v37, 114
    %v1401 = vpop.permute.xlu0 %1400
    %1402 = vrot.lane.b32.xlu0 %v38, 114
    %v1403 = vpop.permute.xlu0 %1402
    %1404 = vrot.lane.b32.xlu0 %v39, 114
    %v1405 = vpop.permute.xlu0 %1404
    %1406 = vrot.lane.b32.xlu0 %v102, 114
    %v1407 = vpop.permute.xlu0 %1406
    %vm1408 = vcmask 932864
    %v1409 = vsel %vm1408, %v1391, %v1393
    %v1410 = vsel %vm1408, %v1393, %v1395
    %v1411 = vsel %vm1408, %v1395, %v1397
    %v1412 = vsel %vm1408, %v1397, %v1399
    %v1413 = vsel %vm1408, %v1399, %v1401
    %v1414 = vsel %vm1408, %v1401, %v1403
    %v1415 = vsel %vm1408, %v1403, %v1405
    %v1416 = vsel %vm1408, %v1405, %v1407
    %v1425 = vadd.f32 %v1340, %v1409
    %v1426 = vadd.f32 %v1341, %v1410
    %v1427 = vadd.f32 %v1342, %v1411
    %v1428 = vadd.f32 %v1343, %v1412
    %v1429 = vadd.f32 %v1344, %v1413
    %v1430 = vadd.f32 %v1345, %v1414
    %v1431 = vadd.f32 %v1346, %v1415
    %v1432 = vadd.f32 %v1347, %v1416
    %v1433 = vadd.f32 %v1382, %v1409
    %v1434 = vadd.f32 %v1383, %v1410
    %v1435 = vadd.f32 %v1384, %v1411
    %v1436 = vadd.f32 %v1385, %v1412
    %v1437 = vadd.f32 %v1386, %v1413
    %v1438 = vadd.f32 %v1387, %v1414
    %v1439 = vadd.f32 %v1388, %v1415
    %v1440 = vadd.f32 %v1389, %v1416
    %1441 = vst [vmem:[#allocation5] sm:$0xff] 0.0
    %1442 = vst [vmem:[#allocation5 + $0x8] sm:$0xff] 0.0
    %1443 = vst [vmem:[#allocation5 + $0x10] sm:$0xff] 0.0
    %1444 = vst [vmem:[#allocation5 + $0x18] sm:$0xff] 0.0
    %1445 = vst [vmem:[#allocation5 + $0x20] sm:$0xff] 0.0
    %1446 = vst [vmem:[#allocation5 + $0x28] sm:$0xff] 0.0
    %1447 = vst [vmem:[#allocation5 + $0x30] sm:$0xff] 0.0
    %1448 = vst [vmem:[#allocation5 + $0x38] sm:$0xff] 0.0
    %1449 = vst [vmem:[#allocation5 + $0x40] sm:$0xff] 0.0
    %1450 = vst [vmem:[#allocation5 + $0x48] sm:$0xff] 0.0
    %1451 = vst [vmem:[#allocation5 + $0x50] sm:$0xff] 0.0
    %1452 = vst [vmem:[#allocation5 + $0x58] sm:$0xff] 0.0
    %1453 = vst [vmem:[#allocation5 + $0x60] sm:$0xff] 0.0
    %1454 = vst [vmem:[#allocation5 + $0x68] sm:$0xff] 0.0
    %1455 = vst [vmem:[#allocation5 + $0x70] sm:$0xff] 0.0
    %1456 = vst [vmem:[#allocation5 + $0x78] sm:$0xff] 0.0
    %1457 = vst [vmem:[#allocation5 + $0x80] sm:$0xff] 0.0
    %1458 = vst [vmem:[#allocation5 + $0x88] sm:$0xff] 0.0
    %1459 = vst [vmem:[#allocation5 + $0x90] sm:$0xff] 0.0
    %1460 = vst [vmem:[#allocation5 + $0x98] sm:$0xff] 0.0
    %1461 = vst [vmem:[#allocation5 + $0xa0] sm:$0xff] 0.0
    %1462 = vst [vmem:[#allocation5 + $0xa8] sm:$0xff] 0.0
    %1463 = vst [vmem:[#allocation5 + $0xb0] sm:$0xff] 0.0
    %1464 = vst [vmem:[#allocation5 + $0xb8] sm:$0xff] 0.0
    %1465 = vst [vmem:[#allocation5 + $0xc0] sm:$0xff] 0.0
    %1466 = vst [vmem:[#allocation5 + $0xc8] sm:$0xff] 0.0
    %1467 = vst [vmem:[#allocation5 + $0xd0] sm:$0xff] 0.0
    %1468 = vst [vmem:[#allocation5 + $0xd8] sm:$0xff] 0.0
    %1469 = vst [vmem:[#allocation5 + $0xe0] sm:$0xff] 0.0
    %1470 = vst [vmem:[#allocation5 + $0xe8] sm:$0xff] 0.0
    %1471 = vst [vmem:[#allocation5 + $0xf0] sm:$0xff] 0.0
    %1472 = vst [vmem:[#allocation5 + $0xf8] sm:$0xff] 0.0
    %1473 = vst [vmem:[#allocation5 + $0x100] sm:$0xff] 0.0
    %1474 = vst [vmem:[#allocation5 + $0x108] sm:$0xff] 0.0
    %1475 = vst [vmem:[#allocation5 + $0x110] sm:$0xff] 0.0
    %1476 = vst [vmem:[#allocation5 + $0x118] sm:$0xff] 0.0
    %1477 = vst [vmem:[#allocation5 + $0x120] sm:$0xff] 0.0
    %1478 = vst [vmem:[#allocation5 + $0x128] sm:$0xff] 0.0
    %1479 = vst [vmem:[#allocation5 + $0x130] sm:$0xff] 0.0
    %1480 = vst [vmem:[#allocation5 + $0x138] sm:$0xff] 0.0
    %1481 = vst [vmem:[#allocation5 + $0x140] sm:$0xff] 0.0
    %1482 = vst [vmem:[#allocation5 + $0x148] sm:$0xff] 0.0
    %1483 = vst [vmem:[#allocation5 + $0x150] sm:$0xff] 0.0
    %1484 = vst [vmem:[#allocation5 + $0x158] sm:$0xff] 0.0
    %1485 = vst [vmem:[#allocation5 + $0x160] sm:$0xff] 0.0
    %1486 = vst [vmem:[#allocation5 + $0x168] sm:$0xff] 0.0
    %1487 = vst [vmem:[#allocation5 + $0x170] sm:$0xff] 0.0
    %1488 = vst [vmem:[#allocation5 + $0x178] sm:$0xff] 0.0
    %1489 = vst [vmem:[#allocation5 + $0x180] sm:$0xff] 0.0
    %1490 = vst [vmem:[#allocation5 + $0x188] sm:$0xff] 0.0
    %1491 = vst [vmem:[#allocation5 + $0x190] sm:$0xff] 0.0
    %1492 = vst [vmem:[#allocation5 + $0x198] sm:$0xff] 0.0
    %1493 = vst [vmem:[#allocation5 + $0x1a0] sm:$0xff] 0.0
    %1494 = vst [vmem:[#allocation5 + $0x1a8] sm:$0xff] 0.0
    %1495 = vst [vmem:[#allocation5 + $0x1b0] sm:$0xff] 0.0
    %1496 = vst [vmem:[#allocation5 + $0x1b8] sm:$0xff] 0.0
    %1497 = vst [vmem:[#allocation5 + $0x1c0] sm:$0xff] 0.0
    %1498 = vst [vmem:[#allocation5 + $0x1c8] sm:$0xff] 0.0
    %1499 = vst [vmem:[#allocation5 + $0x1d0] sm:$0xff] 0.0
    %1500 = vst [vmem:[#allocation5 + $0x1d8] sm:$0xff] 0.0
    %1501 = vst [vmem:[#allocation5 + $0x1e0] sm:$0xff] 0.0
    %1502 = vst [vmem:[#allocation5 + $0x1e8] sm:$0xff] 0.0
    %1503 = vst [vmem:[#allocation5 + $0x1f0] sm:$0xff] 0.0
    %1504 = vst [vmem:[#allocation5 + $0x1f8] sm:$0xff] 0.0
    %1505 = vst [vmem:[#allocation5 + $0x200] sm:$0xff] 0.0
    %vm1506 = vcmask 523264
    %1507 = vst.msk [vmem:[#allocation5 + $0x208] sm:$0xff] %vm1506, 0.0
    %1508 = vst [vmem:[#allocation6] sm:$0xff] 0.0
    %1509 = vst [vmem:[#allocation6 + $0x8] sm:$0xff] 0.0
    %1510 = vst [vmem:[#allocation6 + $0x10] sm:$0xff] 0.0
    %1511 = vst [vmem:[#allocation6 + $0x18] sm:$0xff] 0.0
    %1512 = vst [vmem:[#allocation6 + $0x20] sm:$0xff] 0.0
    %1513 = vst [vmem:[#allocation6 + $0x28] sm:$0xff] 0.0
    %1514 = vst [vmem:[#allocation6 + $0x30] sm:$0xff] 0.0
    %1515 = vst [vmem:[#allocation6 + $0x38] sm:$0xff] 0.0
    %1516 = vst [vmem:[#allocation6 + $0x40] sm:$0xff] 0.0
    %1517 = vst [vmem:[#allocation6 + $0x48] sm:$0xff] 0.0
    %1518 = vst [vmem:[#allocation6 + $0x50] sm:$0xff] 0.0
    %1519 = vst [vmem:[#allocation6 + $0x58] sm:$0xff] 0.0
    %1520 = vst [vmem:[#allocation6 + $0x60] sm:$0xff] 0.0
    %1521 = vst [vmem:[#allocation6 + $0x68] sm:$0xff] 0.0
    %1522 = vst [vmem:[#allocation6 + $0x70] sm:$0xff] 0.0
    %1523 = vst [vmem:[#allocation6 + $0x78] sm:$0xff] 0.0
    %1524 = vst [vmem:[#allocation6 + $0x80] sm:$0xff] 0.0
    %1525 = vst [vmem:[#allocation6 + $0x88] sm:$0xff] 0.0
    %1526 = vst [vmem:[#allocation6 + $0x90] sm:$0xff] 0.0
    %1527 = vst [vmem:[#allocation6 + $0x98] sm:$0xff] 0.0
    %1528 = vst [vmem:[#allocation6 + $0xa0] sm:$0xff] 0.0
    %1529 = vst [vmem:[#allocation6 + $0xa8] sm:$0xff] 0.0
    %1530 = vst [vmem:[#allocation6 + $0xb0] sm:$0xff] 0.0
    %1531 = vst [vmem:[#allocation6 + $0xb8] sm:$0xff] 0.0
    %1532 = vst [vmem:[#allocation6 + $0xc0] sm:$0xff] 0.0
    %1533 = vst [vmem:[#allocation6 + $0xc8] sm:$0xff] 0.0
    %1534 = vst [vmem:[#allocation6 + $0xd0] sm:$0xff] 0.0
    %1535 = vst [vmem:[#allocation6 + $0xd8] sm:$0xff] 0.0
    %1536 = vst [vmem:[#allocation6 + $0xe0] sm:$0xff] 0.0
    %1537 = vst [vmem:[#allocation6 + $0xe8] sm:$0xff] 0.0
    %1538 = vst [vmem:[#allocation6 + $0xf0] sm:$0xff] 0.0
    %1539 = vst [vmem:[#allocation6 + $0xf8] sm:$0xff] 0.0
    %1540 = vst [vmem:[#allocation6 + $0x100] sm:$0xff] 0.0
    %1541 = vst [vmem:[#allocation6 + $0x108] sm:$0xff] 0.0
    %1542 = vst [vmem:[#allocation6 + $0x110] sm:$0xff] 0.0
    %1543 = vst [vmem:[#allocation6 + $0x118] sm:$0xff] 0.0
    %1544 = vst [vmem:[#allocation6 + $0x120] sm:$0xff] 0.0
    %1545 = vst [vmem:[#allocation6 + $0x128] sm:$0xff] 0.0
    %1546 = vst [vmem:[#allocation6 + $0x130] sm:$0xff] 0.0
    %1547 = vst [vmem:[#allocation6 + $0x138] sm:$0xff] 0.0
    %1548 = vst [vmem:[#allocation6 + $0x140] sm:$0xff] 0.0
    %1549 = vst [vmem:[#allocation6 + $0x148] sm:$0xff] 0.0
    %1550 = vst [vmem:[#allocation6 + $0x150] sm:$0xff] 0.0
    %1551 = vst [vmem:[#allocation6 + $0x158] sm:$0xff] 0.0
    %1552 = vst [vmem:[#allocation6 + $0x160] sm:$0xff] 0.0
    %1553 = vst [vmem:[#allocation6 + $0x168] sm:$0xff] 0.0
    %1554 = vst [vmem:[#allocation6 + $0x170] sm:$0xff] 0.0
    %1555 = vst [vmem:[#allocation6 + $0x178] sm:$0xff] 0.0
    %1556 = vst [vmem:[#allocation6 + $0x180] sm:$0xff] 0.0
    %1557 = vst [vmem:[#allocation6 + $0x188] sm:$0xff] 0.0
    %1558 = vst [vmem:[#allocation6 + $0x190] sm:$0xff] 0.0
    %1559 = vst [vmem:[#allocation6 + $0x198] sm:$0xff] 0.0
    %1560 = vst [vmem:[#allocation6 + $0x1a0] sm:$0xff] 0.0
    %1561 = vst [vmem:[#allocation6 + $0x1a8] sm:$0xff] 0.0
    %1562 = vst [vmem:[#allocation6 + $0x1b0] sm:$0xff] 0.0
    %1563 = vst [vmem:[#allocation6 + $0x1b8] sm:$0xff] 0.0
    %1564 = vst [vmem:[#allocation6 + $0x1c0] sm:$0xff] 0.0
    %1565 = vst [vmem:[#allocation6 + $0x1c8] sm:$0xff] 0.0
    %1566 = vst [vmem:[#allocation6 + $0x1d0] sm:$0xff] 0.0
    %1567 = vst [vmem:[#allocation6 + $0x1d8] sm:$0xff] 0.0
    %1568 = vst [vmem:[#allocation6 + $0x1e0] sm:$0xff] 0.0
    %1569 = vst [vmem:[#allocation6 + $0x1e8] sm:$0xff] 0.0
    %1570 = vst [vmem:[#allocation6 + $0x1f0] sm:$0xff] 0.0
    %1571 = vst [vmem:[#allocation6 + $0x1f8] sm:$0xff] 0.0
    %1572 = vst [vmem:[#allocation6 + $0x200] sm:$0xff] 0.0
    %1573 = vst.msk [vmem:[#allocation6 + $0x208] sm:$0xff] %vm1506, 0.0
    %1574 = vst [vmem:[#allocation5 + $0x8] sm:$0xff] %v1425
    %1575 = vst [vmem:[#allocation5 + $0x10] sm:$0xff] %v1426
    %1576 = vst [vmem:[#allocation5 + $0x18] sm:$0xff] %v1427
    %1577 = vst [vmem:[#allocation5 + $0x20] sm:$0xff] %v1428
    %1578 = vst [vmem:[#allocation5 + $0x28] sm:$0xff] %v1429
    %1579 = vst [vmem:[#allocation5 + $0x30] sm:$0xff] %v1430
    %1580 = vst [vmem:[#allocation5 + $0x38] sm:$0xff] %v1431
    %1581 = vst [vmem:[#allocation5 + $0x40] sm:$0xff] %v1432
    %1582 = vst [vmem:[#allocation6 + $0x8] sm:$0xff] %v1433
    %1583 = vst [vmem:[#allocation6 + $0x10] sm:$0xff] %v1434
    %1584 = vst [vmem:[#allocation6 + $0x18] sm:$0xff] %v1435
    %1585 = vst [vmem:[#allocation6 + $0x20] sm:$0xff] %v1436
    %1586 = vst [vmem:[#allocation6 + $0x28] sm:$0xff] %v1437
    %1587 = vst [vmem:[#allocation6 + $0x30] sm:$0xff] %v1438
    %1588 = vst [vmem:[#allocation6 + $0x38] sm:$0xff] %v1439
    %1589 = vst [vmem:[#allocation6 + $0x40] sm:$0xff] %v1440
    // Predicated region
    $region10: #{tpu_custom_call.1} parent=1 // pred_check
      _
    $region11: #{tpu_custom_call.1} parent=1 // pred_check_branch
      %1591 = sbr.rel (0) target = $region13
    $region12: #{tpu_custom_call.1} parent=1 // pred_region
      %s1593 = ssub.s32 8448, 8448
      %1594 = vsyncadd [#allocation4], %s1593
      %s1596 = sshll.u32 [#allocation5], 4
      %s1597 = int_to_ptr.vmem [resolvable:$true] %s1596
      %1599 = dma.vmem_to_hbm [thread:$0]  %s1597, 8448, %s1, [#allocation4]
    $region13: #{tpu_custom_call.1} parent=1 // pred_fallthru
      _
    // Predicated region
    $region14: #{tpu_custom_call.1} parent=1 // pred_check
      _
    $region15: #{tpu_custom_call.1} parent=1 // pred_check_branch
      %1601 = sbr.rel (0) target = $region17
    $region16: #{tpu_custom_call.1} parent=1 // pred_region
      %s1603 = ssub.s32 8448, 8448
      %1604 = vsyncadd [#allocation7], %s1603
      %s1606 = sshll.u32 [#allocation6], 4
      %s1607 = int_to_ptr.vmem [resolvable:$true] %s1606
      %1609 = dma.vmem_to_hbm [thread:$0]  %s1607, 8448, %s2, [#allocation7]
    $region17: #{tpu_custom_call.1} parent=1 // pred_fallthru
      _
    // Predicated region
    $region18: #{tpu_custom_call.1} parent=1 // pred_check
      _
    $region19: #{tpu_custom_call.1} parent=1 // pred_check_branch
      %1611 = sbr.rel (0) target = $region21
    $region20: #{tpu_custom_call.1} parent=1 // pred_region
      %1612 = dma.done [#allocation4], 8448
    $region21: #{tpu_custom_call.1} parent=1 // pred_fallthru
      _
    // Predicated region
    $region22: #{tpu_custom_call.1} parent=1 // pred_check
      _
    $region23: #{tpu_custom_call.1} parent=1 // pred_check_branch
      %1614 = sbr.rel (0) target = $region25
    $region24: #{tpu_custom_call.1} parent=1 // pred_region
      %1615 = dma.done [#allocation7], 8448
    $region25: #{tpu_custom_call.1} parent=1 // pred_fallthru
      _
    %1616 = vsyncpa [#allocation3], 1
    %1617 = vsyncpa [#allocation4], 1
    %1618 = vsyncpa [#allocation7], 1

</llo_original>
